<compile_context>
chip_gen: v5e
topology: v5e:2x2
jax: 0.10.0
libtpu: 0.0.40
codegen_flags: <defaults>
</compile_context>

<pallas_src>
import jax
import jax.numpy as jnp
import numpy as np
from jax.experimental import pallas as pl
from jax.experimental.pallas import tpu as pltpu

_LANE = 128


def _round_up(x, m):
    return (x + m - 1) // m * m


def fused_hypergcn_kernel(h_ref, ht_ref, x_ref, w_ref, b_ref, o_ref):
    """Runs the whole HypergraphConv stack on one (padded) block resident in VMEM."""
    num_layers = w_ref.shape[0]

    # --- Incidence normalization, computed ONCE for the whole stack. -----------------
    # Degrees via XLU lane reductions with f32 accumulation (H arrives as bf16 counts).
    d_deg = jnp.sum(h_ref[...].astype(jnp.float32), axis=1, keepdims=True)   # [Np, 1]
    b_deg = jnp.sum(ht_ref[...].astype(jnp.float32), axis=1, keepdims=True)  # [Ep, 1]
    d_inv = jnp.where(d_deg > 0, 1.0 / d_deg, 0.0)                           # exact, f32
    b_inv = jnp.where(b_deg > 0, 1.0 / b_deg, 0.0)                           # exact, f32

    # P~ = H (B^{-1} H^T): plain [Np,Ep]@[Ep,Np] MXU matmul (wrapper pre-transposed H^T,
    # so Mosaic needs no in-kernel transpose/relayout).  Padded nodes/edges have zero
    # degree -> zero rows/cols, so padding never leaks into real nodes.
    ht_scaled = (ht_ref[...].astype(jnp.float32) * b_inv).astype(jnp.bfloat16)  # [Ep, Np]
    p = jnp.dot(h_ref[...], ht_scaled,
                preferred_element_type=jnp.float32)                          # [Np, Np] f32
    p_bf = p.astype(jnp.bfloat16)

    # --- Layer stack (small fixed L -> static unrolled loop). -------------------------
    act = x_ref[...]                                                         # [Np, Cp] bf16
    out = None
    for layer in range(num_layers):
        w = w_ref[layer]                                                     # [Cp, Cp] bf16
        bias = b_ref[layer]                                                  # [1, Cp]  f32
        xw = jnp.dot(act, w, preferred_element_type=jnp.float32)             # [Np, Cp]
        agg = jnp.dot(p_bf, xw.astype(jnp.bfloat16),
                      preferred_element_type=jnp.float32)                    # [Np, Cp]
        out = d_inv * agg + bias          # D^{-1} row scaling kept exact in f32
        if layer < num_layers - 1:
            act = jnp.maximum(out, 0.0).astype(jnp.bfloat16)                 # ReLU between layers

    o_ref[...] = out.astype(o_ref.dtype)  # lane-dense [Np, Cp] store


def simple_hyper_gcn_forward(x, hyperedge_index, hyperedge_attr, weights, biases,
                             num_nodes, num_edges):
    num_layers = len(weights)
    nnode_out = weights[-1].shape[1]
    c_pad = _round_up(max([x.shape[1]] + [w.shape[1] for w in weights]), _LANE)
    n_pad = _round_up(num_nodes, _LANE)       # node dim padded to 128 (bf16 MXU / packing)
    e_pad = _round_up(num_edges, _LANE)

    # Dense incidence matrix (scatter-ADD matches PyG semantics for duplicate incidences),
    # then shipped in bf16 (small integer counts are exact).  H^T is pre-transposed here so
    # the kernel's P build is a plain contraction with no in-kernel transpose.
    node_idx = hyperedge_index[0]
    edge_idx = hyperedge_index[1]
    h_f32 = jnp.zeros((n_pad, e_pad), jnp.float32).at[node_idx, edge_idx].add(1.0)
    h_bf = h_f32.astype(jnp.bfloat16)                 # [Np, Ep]
    ht_bf = h_f32.T.astype(jnp.bfloat16)              # [Ep, Np]

    # Pad operands to lane-dense shapes; MXU inputs in bf16, biases stay f32.
    x_p = jnp.zeros((n_pad, c_pad), jnp.bfloat16).at[
        :num_nodes, :x.shape[1]].set(x.astype(jnp.bfloat16))
    w_all = jnp.zeros((num_layers, c_pad, c_pad), jnp.bfloat16)
    b_all = jnp.zeros((num_layers, 1, c_pad), jnp.float32)
    for i, (w, b) in enumerate(zip(weights, biases)):
        w_all = w_all.at[i, :w.shape[0], :w.shape[1]].set(w.astype(jnp.bfloat16))
        b_all = b_all.at[i, :, :b.shape[1]].set(b)

    # Advisory cost estimate (lets XLA overlap the H build / padding with kernel warm-up).
    flops = 2 * n_pad * e_pad * n_pad \
        + num_layers * (2 * n_pad * c_pad * c_pad + 2 * n_pad * n_pad * c_pad)
    bytes_accessed = (h_bf.size * 2 + ht_bf.size * 2 + x_p.size * 2
                      + w_all.size * 2 + b_all.size * 4 + n_pad * c_pad * 4)
    cost = pl.CostEstimate(flops=flops, transcendentals=0, bytes_accessed=bytes_accessed)

    # Resident-footprint-sized VMEM limit (inputs + output + P(f32+bf16) + a few f32 temps),
    # with headroom; capped at 64 MiB so it stays valid on v7x.
    resident = (bytes_accessed
                + n_pad * n_pad * 6          # P in f32 + bf16
                + 3 * n_pad * c_pad * 4)     # xw / agg / out f32 temps
    vmem_limit = int(min(max(2 * resident, 16 * 1024 * 1024), 64 * 1024 * 1024))

    out = pl.pallas_call(
        fused_hypergcn_kernel,
        out_shape=jax.ShapeDtypeStruct((n_pad, c_pad), jnp.float32),
        in_specs=[pl.BlockSpec(memory_space=pltpu.MemorySpace.VMEM)] * 5,
        out_specs=pl.BlockSpec(memory_space=pltpu.MemorySpace.VMEM),
        compiler_params=pltpu.CompilerParams(vmem_limit_bytes=vmem_limit),
        cost_estimate=cost,
    )(h_bf, ht_bf, x_p, w_all, b_all)

    return out[:num_nodes, :nnode_out], hyperedge_attr


def _glorot(key, cin, cout):
    limit = np.sqrt(6.0 / (cin + cout))
    return jax.random.uniform(key, (cin, cout), jnp.float32, -limit, limit)


def _reference(x, H, weights, biases):
    # Pure-JAX f32 reference for sanity checking.
    n_layers = len(weights)
    for i in range(n_layers):
        xw = x @ weights[i]
        b_deg = H.sum(axis=0)[:, None]
        b_inv = jnp.where(b_deg > 0, 1.0 / b_deg, 0.0)
        edge = (H.T @ xw) * b_inv
        d_deg = H.sum(axis=1)[:, None]
        d_inv = jnp.where(d_deg > 0, 1.0 / d_deg, 0.0)
        x = (H @ edge) * d_inv + biases[i]
        if i < n_layers - 1:
            x = jnp.maximum(x, 0.0)
    return x


if __name__ == "__main__":
    # Module hyperparameters (small, synthetic).
    nnode_in = 16
    nnode_out = 8
    nedge_in = 4
    nmessage_passing_steps = 3
    hidden = 32

    num_nodes = 32
    num_edges = 8

    key = jax.random.PRNGKey(0)
    k_x, k_attr, *k_w = jax.random.split(key, 2 + nmessage_passing_steps)

    # Inputs.
    x = jax.random.normal(k_x, (num_nodes, nnode_in), jnp.float32)
    hyperedge_attr = jax.random.normal(k_attr, (num_edges, nedge_in), jnp.float32)

    # Each node belongs to exactly two distinct hyperedges.
    nodes = np.arange(num_nodes)
    node_ids = np.concatenate([nodes, nodes])
    edge_ids = np.concatenate([nodes % num_edges, (nodes + 3) % num_edges])
    hyperedge_index = jnp.asarray(np.stack([node_ids, edge_ids]), dtype=jnp.int32)  # [2, 2N]

    # Deterministic parameter init (glorot weights, zero bias) per HypergraphConv.
    dims = [nnode_in] + [hidden] * (nmessage_passing_steps - 1) + [nnode_out]
    weights = [_glorot(k_w[i], dims[i], dims[i + 1]) for i in range(nmessage_passing_steps)]
    biases = [jnp.zeros((1, dims[i + 1]), jnp.float32) for i in range(nmessage_passing_steps)]

    out_x, out_attr = simple_hyper_gcn_forward(
        x, hyperedge_index, hyperedge_attr, weights, biases, num_nodes, num_edges)
    out_x = jax.block_until_ready(out_x)
    out_attr = jax.block_until_ready(out_attr)

    # Sanity check against a pure-JAX dense f32 reference (tolerance accounts for bf16 MXU
    # inputs with f32 accumulation across 3 layers).
    H = jnp.zeros((num_nodes, num_edges), jnp.float32).at[
        hyperedge_index[0], hyperedge_index[1]].add(1.0)
    ref = _reference(x, H, weights, biases)
    assert out_x.shape == (num_nodes, nnode_out)
    assert out_attr.shape == (num_edges, nedge_in)
    np.testing.assert_allclose(np.asarray(out_x), np.asarray(ref), rtol=2e-2, atol=2e-2)

    print("KERNEL_OK")
</pallas_src>

<mosaic_0001>
module attributes {stable_mosaic.version = 11 : i64} {
  func.func @fused_hypergcn_kernel(%arg0: memref<128x128xbf16, #tpu.memory_space<vmem>>, %arg1: memref<128x128xbf16, #tpu.memory_space<vmem>>, %arg2: memref<128x128xbf16, #tpu.memory_space<vmem>>, %arg3: memref<3x128x128xbf16, #tpu.memory_space<vmem>>, %arg4: memref<3x1x128xf32, #tpu.memory_space<vmem>>, %arg5: memref<128x128xf32, #tpu.memory_space<vmem>>) attributes {dimension_semantics = [], scalar_prefetch = 0 : i64, scratch_operands = 0 : i64, tpu.core_type = #tpu.core_type<tc>} {
    %c0 = arith.constant 0 : index
    %c0_0 = arith.constant 0 : index
    %0 = vector.load %arg0[%c0, %c0_0] : memref<128x128xbf16, #tpu.memory_space<vmem>>, vector<128x128xbf16>
    %1 = arith.extf %0 : vector<128x128xbf16> to vector<128x128xf32>
    %cst = arith.constant dense<0.000000e+00> : vector<128xf32>
    %2 = vector.multi_reduction <add>, %1, %cst [1] : vector<128x128xf32> to vector<128xf32>
    %3 = vector.shape_cast %2 : vector<128xf32> to vector<128x1xf32>
    %c0_1 = arith.constant 0 : index
    %c0_2 = arith.constant 0 : index
    %4 = vector.load %arg1[%c0_1, %c0_2] : memref<128x128xbf16, #tpu.memory_space<vmem>>, vector<128x128xbf16>
    %5 = arith.extf %4 : vector<128x128xbf16> to vector<128x128xf32>
    %cst_3 = arith.constant dense<0.000000e+00> : vector<128xf32>
    %6 = vector.multi_reduction <add>, %5, %cst_3 [1] : vector<128x128xf32> to vector<128xf32>
    %7 = vector.shape_cast %6 : vector<128xf32> to vector<128x1xf32>
    %cst_4 = arith.constant 0.000000e+00 : f32
    %8 = vector.broadcast %cst_4 : f32 to vector<128x1xf32>
    %9 = arith.cmpf ogt, %3, %8 : vector<128x1xf32>
    %cst_5 = arith.constant 1.000000e+00 : f32
    %10 = vector.broadcast %cst_5 : f32 to vector<128x1xf32>
    %11 = arith.divf %10, %3 : vector<128x1xf32>
    %cst_6 = arith.constant 0.000000e+00 : f32
    %12 = vector.broadcast %cst_6 : f32 to vector<128x1xf32>
    %13 = arith.select %9, %11, %12 : vector<128x1xi1>, vector<128x1xf32>
    %cst_7 = arith.constant 0.000000e+00 : f32
    %14 = vector.broadcast %cst_7 : f32 to vector<128x1xf32>
    %15 = arith.cmpf ogt, %7, %14 : vector<128x1xf32>
    %cst_8 = arith.constant 1.000000e+00 : f32
    %16 = vector.broadcast %cst_8 : f32 to vector<128x1xf32>
    %17 = arith.divf %16, %7 : vector<128x1xf32>
    %cst_9 = arith.constant 0.000000e+00 : f32
    %18 = vector.broadcast %cst_9 : f32 to vector<128x1xf32>
    %19 = arith.select %15, %17, %18 : vector<128x1xi1>, vector<128x1xf32>
    %c0_10 = arith.constant 0 : index
    %c0_11 = arith.constant 0 : index
    %20 = vector.load %arg1[%c0_10, %c0_11] : memref<128x128xbf16, #tpu.memory_space<vmem>>, vector<128x128xbf16>
    %21 = arith.extf %20 : vector<128x128xbf16> to vector<128x128xf32>
    %22 = vector.broadcast %19 : vector<128x1xf32> to vector<128x128xf32>
    %23 = arith.mulf %21, %22 : vector<128x128xf32>
    %24 = arith.truncf %23 : vector<128x128xf32> to vector<128x128xbf16>
    %c0_12 = arith.constant 0 : index
    %c0_13 = arith.constant 0 : index
    %25 = vector.load %arg0[%c0_12, %c0_13] : memref<128x128xbf16, #tpu.memory_space<vmem>>, vector<128x128xbf16>
    %cst_14 = arith.constant dense<0.000000e+00> : vector<128x128xf32>
    %26 = tpu.matmul %25, %24, %cst_14 {dimension_numbers = #tpu.dot_dimension_numbers<[1], [0], [0], [1], [0, 0, 1, 1], [], []>} : vector<128x128xbf16>, vector<128x128xbf16>, vector<128x128xf32> -> vector<128x128xf32>
    %27 = arith.truncf %26 : vector<128x128xf32> to vector<128x128xbf16>
    %c0_15 = arith.constant 0 : index
    %c0_16 = arith.constant 0 : index
    %28 = vector.load %arg2[%c0_15, %c0_16] : memref<128x128xbf16, #tpu.memory_space<vmem>>, vector<128x128xbf16>
    %c0_17 = arith.constant 0 : index
    %c0_18 = arith.constant 0 : index
    %c0_19 = arith.constant 0 : index
    %29 = vector.load %arg3[%c0_17, %c0_18, %c0_19] : memref<3x128x128xbf16, #tpu.memory_space<vmem>>, vector<1x128x128xbf16>
    %30 = vector.shape_cast %29 : vector<1x128x128xbf16> to vector<128x128xbf16>
    %c0_20 = arith.constant 0 : index
    %c0_21 = arith.constant 0 : index
    %c0_22 = arith.constant 0 : index
    %31 = vector.load %arg4[%c0_20, %c0_21, %c0_22] : memref<3x1x128xf32, #tpu.memory_space<vmem>>, vector<1x1x128xf32>
    %32 = vector.shape_cast %31 : vector<1x1x128xf32> to vector<1x128xf32>
    %cst_23 = arith.constant dense<0.000000e+00> : vector<128x128xf32>
    %33 = tpu.matmul %28, %30, %cst_23 {dimension_numbers = #tpu.dot_dimension_numbers<[1], [0], [0], [1], [0, 0, 1, 1], [], []>} : vector<128x128xbf16>, vector<128x128xbf16>, vector<128x128xf32> -> vector<128x128xf32>
    %34 = arith.truncf %33 : vector<128x128xf32> to vector<128x128xbf16>
    %cst_24 = arith.constant dense<0.000000e+00> : vector<128x128xf32>
    %35 = tpu.matmul %27, %34, %cst_24 {dimension_numbers = #tpu.dot_dimension_numbers<[1], [0], [0], [1], [0, 0, 1, 1], [], []>} : vector<128x128xbf16>, vector<128x128xbf16>, vector<128x128xf32> -> vector<128x128xf32>
    %36 = vector.broadcast %13 : vector<128x1xf32> to vector<128x128xf32>
    %37 = arith.mulf %36, %35 : vector<128x128xf32>
    %38 = vector.broadcast %32 : vector<1x128xf32> to vector<128x128xf32>
    %39 = arith.addf %37, %38 : vector<128x128xf32>
    %cst_25 = arith.constant 0.000000e+00 : f32
    %40 = vector.broadcast %cst_25 : f32 to vector<128x128xf32>
    %41 = arith.maximumf %39, %40 : vector<128x128xf32>
    %42 = arith.truncf %41 : vector<128x128xf32> to vector<128x128xbf16>
    %c1 = arith.constant 1 : index
    %c0_26 = arith.constant 0 : index
    %c0_27 = arith.constant 0 : index
    %43 = vector.load %arg3[%c1, %c0_26, %c0_27] : memref<3x128x128xbf16, #tpu.memory_space<vmem>>, vector<1x128x128xbf16>
    %44 = vector.shape_cast %43 : vector<1x128x128xbf16> to vector<128x128xbf16>
    %c1_28 = arith.constant 1 : index
    %c0_29 = arith.constant 0 : index
    %c0_30 = arith.constant 0 : index
    %45 = vector.load %arg4[%c1_28, %c0_29, %c0_30] : memref<3x1x128xf32, #tpu.memory_space<vmem>>, vector<1x1x128xf32>
    %46 = vector.shape_cast %45 : vector<1x1x128xf32> to vector<1x128xf32>
    %cst_31 = arith.constant dense<0.000000e+00> : vector<128x128xf32>
    %47 = tpu.matmul %42, %44, %cst_31 {dimension_numbers = #tpu.dot_dimension_numbers<[1], [0], [0], [1], [0, 0, 1, 1], [], []>} : vector<128x128xbf16>, vector<128x128xbf16>, vector<128x128xf32> -> vector<128x128xf32>
    %48 = arith.truncf %47 : vector<128x128xf32> to vector<128x128xbf16>
    %cst_32 = arith.constant dense<0.000000e+00> : vector<128x128xf32>
    %49 = tpu.matmul %27, %48, %cst_32 {dimension_numbers = #tpu.dot_dimension_numbers<[1], [0], [0], [1], [0, 0, 1, 1], [], []>} : vector<128x128xbf16>, vector<128x128xbf16>, vector<128x128xf32> -> vector<128x128xf32>
    %50 = vector.broadcast %13 : vector<128x1xf32> to vector<128x128xf32>
    %51 = arith.mulf %50, %49 : vector<128x128xf32>
    %52 = vector.broadcast %46 : vector<1x128xf32> to vector<128x128xf32>
    %53 = arith.addf %51, %52 : vector<128x128xf32>
    %cst_33 = arith.constant 0.000000e+00 : f32
    %54 = vector.broadcast %cst_33 : f32 to vector<128x128xf32>
    %55 = arith.maximumf %53, %54 : vector<128x128xf32>
    %56 = arith.truncf %55 : vector<128x128xf32> to vector<128x128xbf16>
    %c2 = arith.constant 2 : index
    %c0_34 = arith.constant 0 : index
    %c0_35 = arith.constant 0 : index
    %57 = vector.load %arg3[%c2, %c0_34, %c0_35] : memref<3x128x128xbf16, #tpu.memory_space<vmem>>, vector<1x128x128xbf16>
    %58 = vector.shape_cast %57 : vector<1x128x128xbf16> to vector<128x128xbf16>
    %c2_36 = arith.constant 2 : index
    %c0_37 = arith.constant 0 : index
    %c0_38 = arith.constant 0 : index
    %59 = vector.load %arg4[%c2_36, %c0_37, %c0_38] : memref<3x1x128xf32, #tpu.memory_space<vmem>>, vector<1x1x128xf32>
    %60 = vector.shape_cast %59 : vector<1x1x128xf32> to vector<1x128xf32>
    %cst_39 = arith.constant dense<0.000000e+00> : vector<128x128xf32>
    %61 = tpu.matmul %56, %58, %cst_39 {dimension_numbers = #tpu.dot_dimension_numbers<[1], [0], [0], [1], [0, 0, 1, 1], [], []>} : vector<128x128xbf16>, vector<128x128xbf16>, vector<128x128xf32> -> vector<128x128xf32>
    %62 = arith.truncf %61 : vector<128x128xf32> to vector<128x128xbf16>
    %cst_40 = arith.constant dense<0.000000e+00> : vector<128x128xf32>
    %63 = tpu.matmul %27, %62, %cst_40 {dimension_numbers = #tpu.dot_dimension_numbers<[1], [0], [0], [1], [0, 0, 1, 1], [], []>} : vector<128x128xbf16>, vector<128x128xbf16>, vector<128x128xf32> -> vector<128x128xf32>
    %64 = vector.broadcast %13 : vector<128x1xf32> to vector<128x128xf32>
    %65 = arith.mulf %64, %63 : vector<128x128xf32>
    %66 = vector.broadcast %60 : vector<1x128xf32> to vector<128x128xf32>
    %67 = arith.addf %65, %66 : vector<128x128xf32>
    %c0_41 = arith.constant 0 : index
    %c0_42 = arith.constant 0 : index
    %68 = vector.load %arg5[%c0_41, %c0_42] : memref<128x128xf32, #tpu.memory_space<vmem>>, vector<128x128xf32>
    tpu.vector_store %arg5[%c0_41, %c0_42], %67 {strides = array<i32>} : memref<128x128xf32, #tpu.memory_space<vmem>>, vector<128x128xf32>,
    return
  }
}

</mosaic_0001>

<llo_original>
// kernel: tpu_custom_call.1
$region0: #{tpu_custom_call.1}
  #allocation0 [shape = 'u32[]', space=smem, size = 0x4, offset = 0x4, fixed_abs, tag = 'smem constant byte address 0x4 - core index']
  #allocation1 [shape = 'u32[72,128]{1,0:T(1,128)}', space=vmem, size = 0x9000, scoped, tag = 'internal scratch']
  %s0 = inlined_call_operand.hbm [shape: bf16[128,128], index: 0, kind: input, shape index: {}]
  %s1 = inlined_call_operand.hbm [shape: bf16[128,128], index: 1, kind: input, shape index: {}]
  %s2 = inlined_call_operand.hbm [shape: bf16[128,128], index: 2, kind: input, shape index: {}]
  %s3 = inlined_call_operand.hbm [shape: bf16[3,128,128], index: 3, kind: input, shape index: {}]
  %s4 = inlined_call_operand.vmem [shape: f32[3,1,128], index: 4, kind: input, shape index: {}]
  %s5 = inlined_call_operand.hbm [shape: f32[128,128], index: 5, kind: output, shape index: {}]
  %s6 = sld [smem:[#allocation0]]
  $region46: #{tpu_custom_call.1} parent=0
    _
  %s8 = ssub.s32 1, %s6
  %s9 = scalar_select 0, %s8, %s6
  $region1: #{tpu_custom_call.1} parent=0
    #allocation2 [shape = 'u8[32768]{0}', space=vmem, size = 0x8000, scoped, tag = 'input window, operand 0, single buffered']
    #allocation3 [shape = 's32[1]{0}', space=sflag, size = 0x4, scoped, tag = 'scoped memory for tpu_custom_call.1']
    #allocation4 [shape = 's32[1]{0}', space=sflag, size = 0x4, scoped, tag = 'scoped memory for tpu_custom_call.1']
    #allocation5 [shape = 'u8[32768]{0}', space=vmem, size = 0x8000, scoped, tag = 'input window, operand 1, single buffered']
    #allocation6 [shape = 's32[1]{0}', space=sflag, size = 0x4, scoped, tag = 'scoped memory for tpu_custom_call.1']
    #allocation7 [shape = 'u8[32768]{0}', space=vmem, size = 0x8000, scoped, tag = 'input window, operand 2, single buffered']
    #allocation8 [shape = 'u8[98304]{0}', space=vmem, size = 0x18000, scoped, tag = 'input window, operand 3, single buffered']
    #allocation9 [shape = 's32[1]{0}', space=sflag, size = 0x4, scoped, tag = 'scoped memory for tpu_custom_call.1']
    #allocation10 [shape = 'u8[65536]{0}', space=vmem, size = 0x10000, scoped, tag = 'output window, operand 0, single buffered']
    %10 = vsyncpa [#allocation3], 0
    %11 = vsyncpa [#allocation6], 0
    %12 = vsyncpa [#allocation9], 0
    %13 = vsyncpa [#allocation4], 0
    // Predicated region
    $region2: #{tpu_custom_call.1} parent=1 // pred_check
      _
    $region3: #{tpu_custom_call.1} parent=1 // pred_check_branch
      %15 = sbr.rel (0) target = $region5
    $region4: #{tpu_custom_call.1} parent=1 // pred_region
      %17 = vsyncadd [#allocation3], 0
      %s18 = sshll.u32 %s0, 4
      %s19 = int_to_ptr.hbm [resolvable:$true] %s18
      %s20 = sshll.u32 [#allocation2], 4
      %s21 = int_to_ptr.vmem [resolvable:$true] %s20
      %26 = dma.hbm_to_vmem [thread:$0]  %s19, 1024, %s21, [#allocation3], 64, 64, 4
    $region5: #{tpu_custom_call.1} parent=1 // pred_fallthru
      _
    // Predicated region
    $region6: #{tpu_custom_call.1} parent=1 // pred_check
      _
    $region7: #{tpu_custom_call.1} parent=1 // pred_check_branch
      %28 = sbr.rel (0) target = $region9
    $region8: #{tpu_custom_call.1} parent=1 // pred_region
      %30 = vsyncadd [#allocation6], 0
      %s31 = sshll.u32 %s1, 4
      %s32 = int_to_ptr.hbm [resolvable:$true] %s31
      %s33 = sshll.u32 [#allocation5], 4
      %s34 = int_to_ptr.vmem [resolvable:$true] %s33
      %39 = dma.hbm_to_vmem [thread:$0]  %s32, 1024, %s34, [#allocation6], 64, 64, 4
    $region9: #{tpu_custom_call.1} parent=1 // pred_fallthru
      _
    // Predicated region
    $region10: #{tpu_custom_call.1} parent=1 // pred_check
      _
    $region11: #{tpu_custom_call.1} parent=1 // pred_check_branch
      %41 = sbr.rel (0) target = $region13
    $region12: #{tpu_custom_call.1} parent=1 // pred_region
      %43 = vsyncadd [#allocation6], 0
      %s44 = sshll.u32 %s2, 4
      %s45 = int_to_ptr.hbm [resolvable:$true] %s44
      %s46 = sshll.u32 [#allocation7], 4
      %s47 = int_to_ptr.vmem [resolvable:$true] %s46
      %52 = dma.hbm_to_vmem [thread:$0]  %s45, 1024, %s47, [#allocation6], 64, 64, 4
    $region13: #{tpu_custom_call.1} parent=1 // pred_fallthru
      _
    // Predicated region
    $region14: #{tpu_custom_call.1} parent=1 // pred_check
      _
    $region15: #{tpu_custom_call.1} parent=1 // pred_check_branch
      %54 = sbr.rel (0) target = $region17
    $region16: #{tpu_custom_call.1} parent=1 // pred_region
      %56 = vsyncadd [#allocation9], 0
      %s57 = sshll.u32 %s3, 4
      %s58 = int_to_ptr.hbm [resolvable:$true] %s57
      %s59 = sshll.u32 [#allocation8], 4
      %s60 = int_to_ptr.vmem [resolvable:$true] %s59
      %65 = dma.hbm_to_vmem [thread:$0]  %s58, 3072, %s60, [#allocation9], 64, 64, 4
    $region17: #{tpu_custom_call.1} parent=1 // pred_fallthru
      _
    // Predicated region
    $region18: #{tpu_custom_call.1} parent=1 // pred_check
      _
    $region19: #{tpu_custom_call.1} parent=1 // pred_check_branch
      %67 = sbr.rel (0) target = $region21
    $region20: #{tpu_custom_call.1} parent=1 // pred_region
      _
    $region21: #{tpu_custom_call.1} parent=1 // pred_fallthru
      _
    // Predicated region
    $region22: #{tpu_custom_call.1} parent=1 // pred_check
      _
    $region23: #{tpu_custom_call.1} parent=1 // pred_check_branch
      %69 = sbr.rel (0) target = $region25
    $region24: #{tpu_custom_call.1} parent=1 // pred_region
      %71 = dma.done [#allocation3], 1024
    $region25: #{tpu_custom_call.1} parent=1 // pred_fallthru
      _
    // Predicated region
    $region26: #{tpu_custom_call.1} parent=1 // pred_check
      _
    $region27: #{tpu_custom_call.1} parent=1 // pred_check_branch
      %73 = sbr.rel (0) target = $region29
    $region28: #{tpu_custom_call.1} parent=1 // pred_region
      %75 = dma.done [#allocation6], 1024
    $region29: #{tpu_custom_call.1} parent=1 // pred_fallthru
      _
    // Predicated region
    $region30: #{tpu_custom_call.1} parent=1 // pred_check
      _
    $region31: #{tpu_custom_call.1} parent=1 // pred_check_branch
      %77 = sbr.rel (0) target = $region33
    $region32: #{tpu_custom_call.1} parent=1 // pred_region
      %79 = dma.done [#allocation6], 1024
    $region33: #{tpu_custom_call.1} parent=1 // pred_fallthru
      _
    // Predicated region
    $region34: #{tpu_custom_call.1} parent=1 // pred_check
      _
    $region35: #{tpu_custom_call.1} parent=1 // pred_check_branch
      %81 = sbr.rel (0) target = $region37
    $region36: #{tpu_custom_call.1} parent=1 // pred_region
      %83 = dma.done [#allocation9], 3072
    $region37: #{tpu_custom_call.1} parent=1 // pred_fallthru
      _
    %v84 = vld [vmem:[#allocation2] sm:$0xf]
    %v85 = vld [vmem:[#allocation2 + $0x4] sm:$0xf]
    %v86 = vld [vmem:[#allocation2 + $0x8] sm:$0xf]
    %v87 = vld [vmem:[#allocation2 + $0xc] sm:$0xf]
    %v88 = vld [vmem:[#allocation2 + $0x10] sm:$0xf]
    %v89 = vld [vmem:[#allocation2 + $0x14] sm:$0xf]
    %v90 = vld [vmem:[#allocation2 + $0x18] sm:$0xf]
    %v91 = vld [vmem:[#allocation2 + $0x1c] sm:$0xf]
    %v92 = vld [vmem:[#allocation2 + $0x20] sm:$0xf]
    %v93 = vld [vmem:[#allocation2 + $0x24] sm:$0xf]
    %v94 = vld [vmem:[#allocation2 + $0x28] sm:$0xf]
    %v95 = vld [vmem:[#allocation2 + $0x2c] sm:$0xf]
    %v96 = vld [vmem:[#allocation2 + $0x30] sm:$0xf]
    %v97 = vld [vmem:[#allocation2 + $0x34] sm:$0xf]
    %v98 = vld [vmem:[#allocation2 + $0x38] sm:$0xf]
    %v99 = vld [vmem:[#allocation2 + $0x3c] sm:$0xf]
    %v100 = vunpack.c.l.bf16 %v84
    %v101 = vunpack.c.l.bf16 %v85
    %v102 = vunpack.c.l.bf16 %v86
    %v103 = vunpack.c.l.bf16 %v87
    %v104 = vunpack.c.l.bf16 %v88
    %v105 = vunpack.c.l.bf16 %v89
    %v106 = vunpack.c.l.bf16 %v90
    %v107 = vunpack.c.l.bf16 %v91
    %v108 = vunpack.c.l.bf16 %v92
    %v109 = vunpack.c.l.bf16 %v93
    %v110 = vunpack.c.l.bf16 %v94
    %v111 = vunpack.c.l.bf16 %v95
    %v112 = vunpack.c.l.bf16 %v96
    %v113 = vunpack.c.l.bf16 %v97
    %v114 = vunpack.c.l.bf16 %v98
    %v115 = vunpack.c.l.bf16 %v99
    %116 = vadd.xlane.f32.xlu0 %v100
    %v117 = vpop.xlane.xlu0 %116
    %118 = vadd.xlane.f32.xlu0 %v101
    %v119 = vpop.xlane.xlu0 %118
    %120 = vadd.xlane.f32.xlu0 %v102
    %v121 = vpop.xlane.xlu0 %120
    %122 = vadd.xlane.f32.xlu0 %v103
    %v123 = vpop.xlane.xlu0 %122
    %124 = vadd.xlane.f32.xlu0 %v104
    %v125 = vpop.xlane.xlu0 %124
    %126 = vadd.xlane.f32.xlu0 %v105
    %v127 = vpop.xlane.xlu0 %126
    %128 = vadd.xlane.f32.xlu0 %v106
    %v129 = vpop.xlane.xlu0 %128
    %130 = vadd.xlane.f32.xlu0 %v107
    %v131 = vpop.xlane.xlu0 %130
    %132 = vadd.xlane.f32.xlu0 %v108
    %v133 = vpop.xlane.xlu0 %132
    %134 = vadd.xlane.f32.xlu0 %v109
    %v135 = vpop.xlane.xlu0 %134
    %136 = vadd.xlane.f32.xlu0 %v110
    %v137 = vpop.xlane.xlu0 %136
    %138 = vadd.xlane.f32.xlu0 %v111
    %v139 = vpop.xlane.xlu0 %138
    %140 = vadd.xlane.f32.xlu0 %v112
    %v141 = vpop.xlane.xlu0 %140
    %142 = vadd.xlane.f32.xlu0 %v113
    %v143 = vpop.xlane.xlu0 %142
    %144 = vadd.xlane.f32.xlu0 %v114
    %v145 = vpop.xlane.xlu0 %144
    %146 = vadd.xlane.f32.xlu0 %v115
    %v147 = vpop.xlane.xlu0 %146
    %v148 = vld [vmem:[#allocation5] sm:$0xf]
    %v149 = vld [vmem:[#allocation5 + $0x4] sm:$0xf]
    %v150 = vld [vmem:[#allocation5 + $0x8] sm:$0xf]
    %v151 = vld [vmem:[#allocation5 + $0xc] sm:$0xf]
    %v152 = vld [vmem:[#allocation5 + $0x10] sm:$0xf]
    %v153 = vld [vmem:[#allocation5 + $0x14] sm:$0xf]
    %v154 = vld [vmem:[#allocation5 + $0x18] sm:$0xf]
    %v155 = vld [vmem:[#allocation5 + $0x1c] sm:$0xf]
    %v156 = vld [vmem:[#allocation5 + $0x20] sm:$0xf]
    %v157 = vld [vmem:[#allocation5 + $0x24] sm:$0xf]
    %v158 = vld [vmem:[#allocation5 + $0x28] sm:$0xf]
    %v159 = vld [vmem:[#allocation5 + $0x2c] sm:$0xf]
    %v160 = vld [vmem:[#allocation5 + $0x30] sm:$0xf]
    %v161 = vld [vmem:[#allocation5 + $0x34] sm:$0xf]
    %v162 = vld [vmem:[#allocation5 + $0x38] sm:$0xf]
    %v163 = vld [vmem:[#allocation5 + $0x3c] sm:$0xf]
    %v164 = vunpack.c.l.bf16 %v148
    %v165 = vunpack.c.l.bf16 %v149
    %v166 = vunpack.c.l.bf16 %v150
    %v167 = vunpack.c.l.bf16 %v151
    %v168 = vunpack.c.l.bf16 %v152
    %v169 = vunpack.c.l.bf16 %v153
    %v170 = vunpack.c.l.bf16 %v154
    %v171 = vunpack.c.l.bf16 %v155
    %v172 = vunpack.c.l.bf16 %v156
    %v173 = vunpack.c.l.bf16 %v157
    %v174 = vunpack.c.l.bf16 %v158
    %v175 = vunpack.c.l.bf16 %v159
    %v176 = vunpack.c.l.bf16 %v160
    %v177 = vunpack.c.l.bf16 %v161
    %v178 = vunpack.c.l.bf16 %v162
    %v179 = vunpack.c.l.bf16 %v163
    %180 = vadd.xlane.f32.xlu0 %v164
    %v181 = vpop.xlane.xlu0 %180
    %182 = vadd.xlane.f32.xlu0 %v165
    %v183 = vpop.xlane.xlu0 %182
    %184 = vadd.xlane.f32.xlu0 %v166
    %v185 = vpop.xlane.xlu0 %184
    %186 = vadd.xlane.f32.xlu0 %v167
    %v187 = vpop.xlane.xlu0 %186
    %188 = vadd.xlane.f32.xlu0 %v168
    %v189 = vpop.xlane.xlu0 %188
    %190 = vadd.xlane.f32.xlu0 %v169
    %v191 = vpop.xlane.xlu0 %190
    %192 = vadd.xlane.f32.xlu0 %v170
    %v193 = vpop.xlane.xlu0 %192
    %194 = vadd.xlane.f32.xlu0 %v171
    %v195 = vpop.xlane.xlu0 %194
    %196 = vadd.xlane.f32.xlu0 %v172
    %v197 = vpop.xlane.xlu0 %196
    %198 = vadd.xlane.f32.xlu0 %v173
    %v199 = vpop.xlane.xlu0 %198
    %200 = vadd.xlane.f32.xlu0 %v174
    %v201 = vpop.xlane.xlu0 %200
    %202 = vadd.xlane.f32.xlu0 %v175
    %v203 = vpop.xlane.xlu0 %202
    %204 = vadd.xlane.f32.xlu0 %v176
    %v205 = vpop.xlane.xlu0 %204
    %206 = vadd.xlane.f32.xlu0 %v177
    %v207 = vpop.xlane.xlu0 %206
    %208 = vadd.xlane.f32.xlu0 %v178
    %v209 = vpop.xlane.xlu0 %208
    %210 = vadd.xlane.f32.xlu0 %v179
    %v211 = vpop.xlane.xlu0 %210
    %vm212 = vcmp.gt.f32.partialorder %v117, 0.0
    %vm213 = vcmp.gt.f32.partialorder %v119, 0.0
    %vm214 = vcmp.gt.f32.partialorder %v121, 0.0
    %vm215 = vcmp.gt.f32.partialorder %v123, 0.0
    %vm216 = vcmp.gt.f32.partialorder %v125, 0.0
    %vm217 = vcmp.gt.f32.partialorder %v127, 0.0
    %vm218 = vcmp.gt.f32.partialorder %v129, 0.0
    %vm219 = vcmp.gt.f32.partialorder %v131, 0.0
    %vm220 = vcmp.gt.f32.partialorder %v133, 0.0
    %vm221 = vcmp.gt.f32.partialorder %v135, 0.0
    %vm222 = vcmp.gt.f32.partialorder %v137, 0.0
    %vm223 = vcmp.gt.f32.partialorder %v139, 0.0
    %vm224 = vcmp.gt.f32.partialorder %v141, 0.0
    %vm225 = vcmp.gt.f32.partialorder %v143, 0.0
    %vm226 = vcmp.gt.f32.partialorder %v145, 0.0
    %vm227 = vcmp.gt.f32.partialorder %v147, 0.0
    %v228 = vrcp.pop %v117
    %v229 = vmul.f32 %v117, %v228
    %v230 = vsub.f32 1.0, %v229
    %v231 = vmul.f32 %v228, %v230
    %v232 = vadd.f32 %v228, %v231
    %vm233 = vweird.f32 %v117
    %vm234 = vweird.f32 %v228
    %vm235 = vmor %vm233, %vm234
    %v236 = vsel %vm235, %v228, %v232
    %v237 = vand.u32 2147483647, %v117
    %vm238 = vcmp.eq.f32.partialorder %v237, 8.507059e+37
    %v239 = vand.u32 %v117, 2147483648
    %v240 = vor.u32 1.1754944e-38, %v239
    %v241 = vsel %vm238, %v240, %v236
    %v242 = vmul.f32 1.0, %v241
    %v243 = vrcp.pop %v119
    %v244 = vmul.f32 %v119, %v243
    %v245 = vsub.f32 1.0, %v244
    %v246 = vmul.f32 %v243, %v245
    %v247 = vadd.f32 %v243, %v246
    %vm248 = vweird.f32 %v119
    %vm249 = vweird.f32 %v243
    %vm250 = vmor %vm248, %vm249
    %v251 = vsel %vm250, %v243, %v247
    %v252 = vand.u32 2147483647, %v119
    %vm253 = vcmp.eq.f32.partialorder %v252, 8.507059e+37
    %v254 = vand.u32 %v119, 2147483648
    %v255 = vor.u32 1.1754944e-38, %v254
    %v256 = vsel %vm253, %v255, %v251
    %v257 = vmul.f32 1.0, %v256
    %v258 = vrcp.pop %v121
    %v259 = vmul.f32 %v121, %v258
    %v260 = vsub.f32 1.0, %v259
    %v261 = vmul.f32 %v258, %v260
    %v262 = vadd.f32 %v258, %v261
    %vm263 = vweird.f32 %v121
    %vm264 = vweird.f32 %v258
    %vm265 = vmor %vm263, %vm264
    %v266 = vsel %vm265, %v258, %v262
    %v267 = vand.u32 2147483647, %v121
    %vm268 = vcmp.eq.f32.partialorder %v267, 8.507059e+37
    %v269 = vand.u32 %v121, 2147483648
    %v270 = vor.u32 1.1754944e-38, %v269
    %v271 = vsel %vm268, %v270, %v266
    %v272 = vmul.f32 1.0, %v271
    %v273 = vrcp.pop %v123
    %v274 = vmul.f32 %v123, %v273
    %v275 = vsub.f32 1.0, %v274
    %v276 = vmul.f32 %v273, %v275
    %v277 = vadd.f32 %v273, %v276
    %vm278 = vweird.f32 %v123
    %vm279 = vweird.f32 %v273
    %vm280 = vmor %vm278, %vm279
    %v281 = vsel %vm280, %v273, %v277
    %v282 = vand.u32 2147483647, %v123
    %vm283 = vcmp.eq.f32.partialorder %v282, 8.507059e+37
    %v284 = vand.u32 %v123, 2147483648
    %v285 = vor.u32 1.1754944e-38, %v284
    %v286 = vsel %vm283, %v285, %v281
    %v287 = vmul.f32 1.0, %v286
    %v288 = vrcp.pop %v125
    %v289 = vmul.f32 %v125, %v288
    %v290 = vsub.f32 1.0, %v289
    %v291 = vmul.f32 %v288, %v290
    %v292 = vadd.f32 %v288, %v291
    %vm293 = vweird.f32 %v125
    %vm294 = vweird.f32 %v288
    %vm295 = vmor %vm293, %vm294
    %v296 = vsel %vm295, %v288, %v292
    %v297 = vand.u32 2147483647, %v125
    %vm298 = vcmp.eq.f32.partialorder %v297, 8.507059e+37
    %v299 = vand.u32 %v125, 2147483648
    %v300 = vor.u32 1.1754944e-38, %v299
    %v301 = vsel %vm298, %v300, %v296
    %v302 = vmul.f32 1.0, %v301
    %v303 = vrcp.pop %v127
    %v304 = vmul.f32 %v127, %v303
    %v305 = vsub.f32 1.0, %v304
    %v306 = vmul.f32 %v303, %v305
    %v307 = vadd.f32 %v303, %v306
    %vm308 = vweird.f32 %v127
    %vm309 = vweird.f32 %v303
    %vm310 = vmor %vm308, %vm309
    %v311 = vsel %vm310, %v303, %v307
    %v312 = vand.u32 2147483647, %v127
    %vm313 = vcmp.eq.f32.partialorder %v312, 8.507059e+37
    %v314 = vand.u32 %v127, 2147483648
    %v315 = vor.u32 1.1754944e-38, %v314
    %v316 = vsel %vm313, %v315, %v311
    %v317 = vmul.f32 1.0, %v316
    %v318 = vrcp.pop %v129
    %v319 = vmul.f32 %v129, %v318
    %v320 = vsub.f32 1.0, %v319
    %v321 = vmul.f32 %v318, %v320
    %v322 = vadd.f32 %v318, %v321
    %vm323 = vweird.f32 %v129
    %vm324 = vweird.f32 %v318
    %vm325 = vmor %vm323, %vm324
    %v326 = vsel %vm325, %v318, %v322
    %v327 = vand.u32 2147483647, %v129
    %vm328 = vcmp.eq.f32.partialorder %v327, 8.507059e+37
    %v329 = vand.u32 %v129, 2147483648
    %v330 = vor.u32 1.1754944e-38, %v329
    %v331 = vsel %vm328, %v330, %v326
    %v332 = vmul.f32 1.0, %v331
    %v333 = vrcp.pop %v131
    %v334 = vmul.f32 %v131, %v333
    %v335 = vsub.f32 1.0, %v334
    %v336 = vmul.f32 %v333, %v335
    %v337 = vadd.f32 %v333, %v336
    %vm338 = vweird.f32 %v131
    %vm339 = vweird.f32 %v333
    %vm340 = vmor %vm338, %vm339
    %v341 = vsel %vm340, %v333, %v337
    %v342 = vand.u32 2147483647, %v131
    %vm343 = vcmp.eq.f32.partialorder %v342, 8.507059e+37
    %v344 = vand.u32 %v131, 2147483648
    %v345 = vor.u32 1.1754944e-38, %v344
    %v346 = vsel %vm343, %v345, %v341
    %v347 = vmul.f32 1.0, %v346
    %v348 = vrcp.pop %v133
    %v349 = vmul.f32 %v133, %v348
    %v350 = vsub.f32 1.0, %v349
    %v351 = vmul.f32 %v348, %v350
    %v352 = vadd.f32 %v348, %v351
    %vm353 = vweird.f32 %v133
    %vm354 = vweird.f32 %v348
    %vm355 = vmor %vm353, %vm354
    %v356 = vsel %vm355, %v348, %v352
    %v357 = vand.u32 2147483647, %v133
    %vm358 = vcmp.eq.f32.partialorder %v357, 8.507059e+37
    %v359 = vand.u32 %v133, 2147483648
    %v360 = vor.u32 1.1754944e-38, %v359
    %v361 = vsel %vm358, %v360, %v356
    %v362 = vmul.f32 1.0, %v361
    %v363 = vrcp.pop %v135
    %v364 = vmul.f32 %v135, %v363
    %v365 = vsub.f32 1.0, %v364
    %v366 = vmul.f32 %v363, %v365
    %v367 = vadd.f32 %v363, %v366
    %vm368 = vweird.f32 %v135
    %vm369 = vweird.f32 %v363
    %vm370 = vmor %vm368, %vm369
    %v371 = vsel %vm370, %v363, %v367
    %v372 = vand.u32 2147483647, %v135
    %vm373 = vcmp.eq.f32.partialorder %v372, 8.507059e+37
    %v374 = vand.u32 %v135, 2147483648
    %v375 = vor.u32 1.1754944e-38, %v374
    %v376 = vsel %vm373, %v375, %v371
    %v377 = vmul.f32 1.0, %v376
    %v378 = vrcp.pop %v137
    %v379 = vmul.f32 %v137, %v378
    %v380 = vsub.f32 1.0, %v379
    %v381 = vmul.f32 %v378, %v380
    %v382 = vadd.f32 %v378, %v381
    %vm383 = vweird.f32 %v137
    %vm384 = vweird.f32 %v378
    %vm385 = vmor %vm383, %vm384
    %v386 = vsel %vm385, %v378, %v382
    %v387 = vand.u32 2147483647, %v137
    %vm388 = vcmp.eq.f32.partialorder %v387, 8.507059e+37
    %v389 = vand.u32 %v137, 2147483648
    %v390 = vor.u32 1.1754944e-38, %v389
    %v391 = vsel %vm388, %v390, %v386
    %v392 = vmul.f32 1.0, %v391
    %v393 = vrcp.pop %v139
    %v394 = vmul.f32 %v139, %v393
    %v395 = vsub.f32 1.0, %v394
    %v396 = vmul.f32 %v393, %v395
    %v397 = vadd.f32 %v393, %v396
    %vm398 = vweird.f32 %v139
    %vm399 = vweird.f32 %v393
    %vm400 = vmor %vm398, %vm399
    %v401 = vsel %vm400, %v393, %v397
    %v402 = vand.u32 2147483647, %v139
    %vm403 = vcmp.eq.f32.partialorder %v402, 8.507059e+37
    %v404 = vand.u32 %v139, 2147483648
    %v405 = vor.u32 1.1754944e-38, %v404
    %v406 = vsel %vm403, %v405, %v401
    %v407 = vmul.f32 1.0, %v406
    %v408 = vrcp.pop %v141
    %v409 = vmul.f32 %v141, %v408
    %v410 = vsub.f32 1.0, %v409
    %v411 = vmul.f32 %v408, %v410
    %v412 = vadd.f32 %v408, %v411
    %vm413 = vweird.f32 %v141
    %vm414 = vweird.f32 %v408
    %vm415 = vmor %vm413, %vm414
    %v416 = vsel %vm415, %v408, %v412
    %v417 = vand.u32 2147483647, %v141
    %vm418 = vcmp.eq.f32.partialorder %v417, 8.507059e+37
    %v419 = vand.u32 %v141, 2147483648
    %v420 = vor.u32 1.1754944e-38, %v419
    %v421 = vsel %vm418, %v420, %v416
    %v422 = vmul.f32 1.0, %v421
    %v423 = vrcp.pop %v143
    %v424 = vmul.f32 %v143, %v423
    %v425 = vsub.f32 1.0, %v424
    %v426 = vmul.f32 %v423, %v425
    %v427 = vadd.f32 %v423, %v426
    %vm428 = vweird.f32 %v143
    %vm429 = vweird.f32 %v423
    %vm430 = vmor %vm428, %vm429
    %v431 = vsel %vm430, %v423, %v427
    %v432 = vand.u32 2147483647, %v143
    %vm433 = vcmp.eq.f32.partialorder %v432, 8.507059e+37
    %v434 = vand.u32 %v143, 2147483648
    %v435 = vor.u32 1.1754944e-38, %v434
    %v436 = vsel %vm433, %v435, %v431
    %v437 = vmul.f32 1.0, %v436
    %v438 = vrcp.pop %v145
    %v439 = vmul.f32 %v145, %v438
    %v440 = vsub.f32 1.0, %v439
    %v441 = vmul.f32 %v438, %v440
    %v442 = vadd.f32 %v438, %v441
    %vm443 = vweird.f32 %v145
    %vm444 = vweird.f32 %v438
    %vm445 = vmor %vm443, %vm444
    %v446 = vsel %vm445, %v438, %v442
    %v447 = vand.u32 2147483647, %v145
    %vm448 = vcmp.eq.f32.partialorder %v447, 8.507059e+37
    %v449 = vand.u32 %v145, 2147483648
    %v450 = vor.u32 1.1754944e-38, %v449
    %v451 = vsel %vm448, %v450, %v446
    %v452 = vmul.f32 1.0, %v451
    %v453 = vrcp.pop %v147
    %v454 = vmul.f32 %v147, %v453
    %v455 = vsub.f32 1.0, %v454
    %v456 = vmul.f32 %v453, %v455
    %v457 = vadd.f32 %v453, %v456
    %vm458 = vweird.f32 %v147
    %vm459 = vweird.f32 %v453
    %vm460 = vmor %vm458, %vm459
    %v461 = vsel %vm460, %v453, %v457
    %v462 = vand.u32 2147483647, %v147
    %vm463 = vcmp.eq.f32.partialorder %v462, 8.507059e+37
    %v464 = vand.u32 %v147, 2147483648
    %v465 = vor.u32 1.1754944e-38, %v464
    %v466 = vsel %vm463, %v465, %v461
    %v467 = vmul.f32 1.0, %v466
    %v468 = vsel %vm212, %v242, 0.0
    %v469 = vsel %vm213, %v257, 0.0
    %v470 = vsel %vm214, %v272, 0.0
    %v471 = vsel %vm215, %v287, 0.0
    %v472 = vsel %vm216, %v302, 0.0
    %v473 = vsel %vm217, %v317, 0.0
    %v474 = vsel %vm218, %v332, 0.0
    %v475 = vsel %vm219, %v347, 0.0
    %v476 = vsel %vm220, %v362, 0.0
    %v477 = vsel %vm221, %v377, 0.0
    %v478 = vsel %vm222, %v392, 0.0
    %v479 = vsel %vm223, %v407, 0.0
    %v480 = vsel %vm224, %v422, 0.0
    %v481 = vsel %vm225, %v437, 0.0
    %v482 = vsel %vm226, %v452, 0.0
    %v483 = vsel %vm227, %v467, 0.0
    %vm484 = vcmp.gt.f32.partialorder %v181, 0.0
    %vm485 = vcmp.gt.f32.partialorder %v183, 0.0
    %vm486 = vcmp.gt.f32.partialorder %v185, 0.0
    %vm487 = vcmp.gt.f32.partialorder %v187, 0.0
    %vm488 = vcmp.gt.f32.partialorder %v189, 0.0
    %vm489 = vcmp.gt.f32.partialorder %v191, 0.0
    %vm490 = vcmp.gt.f32.partialorder %v193, 0.0
    %vm491 = vcmp.gt.f32.partialorder %v195, 0.0
    %vm492 = vcmp.gt.f32.partialorder %v197, 0.0
    %vm493 = vcmp.gt.f32.partialorder %v199, 0.0
    %vm494 = vcmp.gt.f32.partialorder %v201, 0.0
    %vm495 = vcmp.gt.f32.partialorder %v203, 0.0
    %vm496 = vcmp.gt.f32.partialorder %v205, 0.0
    %vm497 = vcmp.gt.f32.partialorder %v207, 0.0
    %vm498 = vcmp.gt.f32.partialorder %v209, 0.0
    %vm499 = vcmp.gt.f32.partialorder %v211, 0.0
    %v500 = vrcp.pop %v181
    %v501 = vmul.f32 %v181, %v500
    %v502 = vsub.f32 1.0, %v501
    %v503 = vmul.f32 %v500, %v502
    %v504 = vadd.f32 %v500, %v503
    %vm505 = vweird.f32 %v181
    %vm506 = vweird.f32 %v500
    %vm507 = vmor %vm505, %vm506
    %v508 = vsel %vm507, %v500, %v504
    %v509 = vand.u32 2147483647, %v181
    %vm510 = vcmp.eq.f32.partialorder %v509, 8.507059e+37
    %v511 = vand.u32 %v181, 2147483648
    %v512 = vor.u32 1.1754944e-38, %v511
    %v513 = vsel %vm510, %v512, %v508
    %v514 = vmul.f32 1.0, %v513
    %v515 = vrcp.pop %v183
    %v516 = vmul.f32 %v183, %v515
    %v517 = vsub.f32 1.0, %v516
    %v518 = vmul.f32 %v515, %v517
    %v519 = vadd.f32 %v515, %v518
    %vm520 = vweird.f32 %v183
    %vm521 = vweird.f32 %v515
    %vm522 = vmor %vm520, %vm521
    %v523 = vsel %vm522, %v515, %v519
    %v524 = vand.u32 2147483647, %v183
    %vm525 = vcmp.eq.f32.partialorder %v524, 8.507059e+37
    %v526 = vand.u32 %v183, 2147483648
    %v527 = vor.u32 1.1754944e-38, %v526
    %v528 = vsel %vm525, %v527, %v523
    %v529 = vmul.f32 1.0, %v528
    %v530 = vrcp.pop %v185
    %v531 = vmul.f32 %v185, %v530
    %v532 = vsub.f32 1.0, %v531
    %v533 = vmul.f32 %v530, %v532
    %v534 = vadd.f32 %v530, %v533
    %vm535 = vweird.f32 %v185
    %vm536 = vweird.f32 %v530
    %vm537 = vmor %vm535, %vm536
    %v538 = vsel %vm537, %v530, %v534
    %v539 = vand.u32 2147483647, %v185
    %vm540 = vcmp.eq.f32.partialorder %v539, 8.507059e+37
    %v541 = vand.u32 %v185, 2147483648
    %v542 = vor.u32 1.1754944e-38, %v541
    %v543 = vsel %vm540, %v542, %v538
    %v544 = vmul.f32 1.0, %v543
    %v545 = vrcp.pop %v187
    %v546 = vmul.f32 %v187, %v545
    %v547 = vsub.f32 1.0, %v546
    %v548 = vmul.f32 %v545, %v547
    %v549 = vadd.f32 %v545, %v548
    %vm550 = vweird.f32 %v187
    %vm551 = vweird.f32 %v545
    %vm552 = vmor %vm550, %vm551
    %v553 = vsel %vm552, %v545, %v549
    %v554 = vand.u32 2147483647, %v187
    %vm555 = vcmp.eq.f32.partialorder %v554, 8.507059e+37
    %v556 = vand.u32 %v187, 2147483648
    %v557 = vor.u32 1.1754944e-38, %v556
    %v558 = vsel %vm555, %v557, %v553
    %v559 = vmul.f32 1.0, %v558
    %v560 = vrcp.pop %v189
    %v561 = vmul.f32 %v189, %v560
    %v562 = vsub.f32 1.0, %v561
    %v563 = vmul.f32 %v560, %v562
    %v564 = vadd.f32 %v560, %v563
    %vm565 = vweird.f32 %v189
    %vm566 = vweird.f32 %v560
    %vm567 = vmor %vm565, %vm566
    %v568 = vsel %vm567, %v560, %v564
    %v569 = vand.u32 2147483647, %v189
    %vm570 = vcmp.eq.f32.partialorder %v569, 8.507059e+37
    %v571 = vand.u32 %v189, 2147483648
    %v572 = vor.u32 1.1754944e-38, %v571
    %v573 = vsel %vm570, %v572, %v568
    %v574 = vmul.f32 1.0, %v573
    %v575 = vrcp.pop %v191
    %v576 = vmul.f32 %v191, %v575
    %v577 = vsub.f32 1.0, %v576
    %v578 = vmul.f32 %v575, %v577
    %v579 = vadd.f32 %v575, %v578
    %vm580 = vweird.f32 %v191
    %vm581 = vweird.f32 %v575
    %vm582 = vmor %vm580, %vm581
    %v583 = vsel %vm582, %v575, %v579
    %v584 = vand.u32 2147483647, %v191
    %vm585 = vcmp.eq.f32.partialorder %v584, 8.507059e+37
    %v586 = vand.u32 %v191, 2147483648
    %v587 = vor.u32 1.1754944e-38, %v586
    %v588 = vsel %vm585, %v587, %v583
    %v589 = vmul.f32 1.0, %v588
    %v590 = vrcp.pop %v193
    %v591 = vmul.f32 %v193, %v590
    %v592 = vsub.f32 1.0, %v591
    %v593 = vmul.f32 %v590, %v592
    %v594 = vadd.f32 %v590, %v593
    %vm595 = vweird.f32 %v193
    %vm596 = vweird.f32 %v590
    %vm597 = vmor %vm595, %vm596
    %v598 = vsel %vm597, %v590, %v594
    %v599 = vand.u32 2147483647, %v193
    %vm600 = vcmp.eq.f32.partialorder %v599, 8.507059e+37
    %v601 = vand.u32 %v193, 2147483648
    %v602 = vor.u32 1.1754944e-38, %v601
    %v603 = vsel %vm600, %v602, %v598
    %v604 = vmul.f32 1.0, %v603
    %v605 = vrcp.pop %v195
    %v606 = vmul.f32 %v195, %v605
    %v607 = vsub.f32 1.0, %v606
    %v608 = vmul.f32 %v605, %v607
    %v609 = vadd.f32 %v605, %v608
    %vm610 = vweird.f32 %v195
    %vm611 = vweird.f32 %v605
    %vm612 = vmor %vm610, %vm611
    %v613 = vsel %vm612, %v605, %v609
    %v614 = vand.u32 2147483647, %v195
    %vm615 = vcmp.eq.f32.partialorder %v614, 8.507059e+37
    %v616 = vand.u32 %v195, 2147483648
    %v617 = vor.u32 1.1754944e-38, %v616
    %v618 = vsel %vm615, %v617, %v613
    %v619 = vmul.f32 1.0, %v618
    %v620 = vrcp.pop %v197
    %v621 = vmul.f32 %v197, %v620
    %v622 = vsub.f32 1.0, %v621
    %v623 = vmul.f32 %v620, %v622
    %v624 = vadd.f32 %v620, %v623
    %vm625 = vweird.f32 %v197
    %vm626 = vweird.f32 %v620
    %vm627 = vmor %vm625, %vm626
    %v628 = vsel %vm627, %v620, %v624
    %v629 = vand.u32 2147483647, %v197
    %vm630 = vcmp.eq.f32.partialorder %v629, 8.507059e+37
    %v631 = vand.u32 %v197, 2147483648
    %v632 = vor.u32 1.1754944e-38, %v631
    %v633 = vsel %vm630, %v632, %v628
    %v634 = vmul.f32 1.0, %v633
    %v635 = vrcp.pop %v199
    %v636 = vmul.f32 %v199, %v635
    %v637 = vsub.f32 1.0, %v636
    %v638 = vmul.f32 %v635, %v637
    %v639 = vadd.f32 %v635, %v638
    %vm640 = vweird.f32 %v199
    %vm641 = vweird.f32 %v635
    %vm642 = vmor %vm640, %vm641
    %v643 = vsel %vm642, %v635, %v639
    %v644 = vand.u32 2147483647, %v199
    %vm645 = vcmp.eq.f32.partialorder %v644, 8.507059e+37
    %v646 = vand.u32 %v199, 2147483648
    %v647 = vor.u32 1.1754944e-38, %v646
    %v648 = vsel %vm645, %v647, %v643
    %v649 = vmul.f32 1.0, %v648
    %v650 = vrcp.pop %v201
    %v651 = vmul.f32 %v201, %v650
    %v652 = vsub.f32 1.0, %v651
    %v653 = vmul.f32 %v650, %v652
    %v654 = vadd.f32 %v650, %v653
    %vm655 = vweird.f32 %v201
    %vm656 = vweird.f32 %v650
    %vm657 = vmor %vm655, %vm656
    %v658 = vsel %vm657, %v650, %v654
    %v659 = vand.u32 2147483647, %v201
    %vm660 = vcmp.eq.f32.partialorder %v659, 8.507059e+37
    %v661 = vand.u32 %v201, 2147483648
    %v662 = vor.u32 1.1754944e-38, %v661
    %v663 = vsel %vm660, %v662, %v658
    %v664 = vmul.f32 1.0, %v663
    %v665 = vrcp.pop %v203
    %v666 = vmul.f32 %v203, %v665
    %v667 = vsub.f32 1.0, %v666
    %v668 = vmul.f32 %v665, %v667
    %v669 = vadd.f32 %v665, %v668
    %vm670 = vweird.f32 %v203
    %vm671 = vweird.f32 %v665
    %vm672 = vmor %vm670, %vm671
    %v673 = vsel %vm672, %v665, %v669
    %v674 = vand.u32 2147483647, %v203
    %vm675 = vcmp.eq.f32.partialorder %v674, 8.507059e+37
    %v676 = vand.u32 %v203, 2147483648
    %v677 = vor.u32 1.1754944e-38, %v676
    %v678 = vsel %vm675, %v677, %v673
    %v679 = vmul.f32 1.0, %v678
    %v680 = vrcp.pop %v205
    %v681 = vmul.f32 %v205, %v680
    %v682 = vsub.f32 1.0, %v681
    %v683 = vmul.f32 %v680, %v682
    %v684 = vadd.f32 %v680, %v683
    %vm685 = vweird.f32 %v205
    %vm686 = vweird.f32 %v680
    %vm687 = vmor %vm685, %vm686
    %v688 = vsel %vm687, %v680, %v684
    %v689 = vand.u32 2147483647, %v205
    %vm690 = vcmp.eq.f32.partialorder %v689, 8.507059e+37
    %v691 = vand.u32 %v205, 2147483648
    %v692 = vor.u32 1.1754944e-38, %v691
    %v693 = vsel %vm690, %v692, %v688
    %v694 = vmul.f32 1.0, %v693
    %v695 = vrcp.pop %v207
    %v696 = vmul.f32 %v207, %v695
    %v697 = vsub.f32 1.0, %v696
    %v698 = vmul.f32 %v695, %v697
    %v699 = vadd.f32 %v695, %v698
    %vm700 = vweird.f32 %v207
    %vm701 = vweird.f32 %v695
    %vm702 = vmor %vm700, %vm701
    %v703 = vsel %vm702, %v695, %v699
    %v704 = vand.u32 2147483647, %v207
    %vm705 = vcmp.eq.f32.partialorder %v704, 8.507059e+37
    %v706 = vand.u32 %v207, 2147483648
    %v707 = vor.u32 1.1754944e-38, %v706
    %v708 = vsel %vm705, %v707, %v703
    %v709 = vmul.f32 1.0, %v708
    %v710 = vrcp.pop %v209
    %v711 = vmul.f32 %v209, %v710
    %v712 = vsub.f32 1.0, %v711
    %v713 = vmul.f32 %v710, %v712
    %v714 = vadd.f32 %v710, %v713
    %vm715 = vweird.f32 %v209
    %vm716 = vweird.f32 %v710
    %vm717 = vmor %vm715, %vm716
    %v718 = vsel %vm717, %v710, %v714
    %v719 = vand.u32 2147483647, %v209
    %vm720 = vcmp.eq.f32.partialorder %v719, 8.507059e+37
    %v721 = vand.u32 %v209, 2147483648
    %v722 = vor.u32 1.1754944e-38, %v721
    %v723 = vsel %vm720, %v722, %v718
    %v724 = vmul.f32 1.0, %v723
    %v725 = vrcp.pop %v211
    %v726 = vmul.f32 %v211, %v725
    %v727 = vsub.f32 1.0, %v726
    %v728 = vmul.f32 %v725, %v727
    %v729 = vadd.f32 %v725, %v728
    %vm730 = vweird.f32 %v211
    %vm731 = vweird.f32 %v725
    %vm732 = vmor %vm730, %vm731
    %v733 = vsel %vm732, %v725, %v729
    %v734 = vand.u32 2147483647, %v211
    %vm735 = vcmp.eq.f32.partialorder %v734, 8.507059e+37
    %v736 = vand.u32 %v211, 2147483648
    %v737 = vor.u32 1.1754944e-38, %v736
    %v738 = vsel %vm735, %v737, %v733
    %v739 = vmul.f32 1.0, %v738
    %v740 = vsel %vm484, %v514, 0.0
    %v741 = vsel %vm485, %v529, 0.0
    %v742 = vsel %vm486, %v544, 0.0
    %v743 = vsel %vm487, %v559, 0.0
    %v744 = vsel %vm488, %v574, 0.0
    %v745 = vsel %vm489, %v589, 0.0
    %v746 = vsel %vm490, %v604, 0.0
    %v747 = vsel %vm491, %v619, 0.0
    %v748 = vsel %vm492, %v634, 0.0
    %v749 = vsel %vm493, %v649, 0.0
    %v750 = vsel %vm494, %v664, 0.0
    %v751 = vsel %vm495, %v679, 0.0
    %v752 = vsel %vm496, %v694, 0.0
    %v753 = vsel %vm497, %v709, 0.0
    %v754 = vsel %vm498, %v724, 0.0
    %v755 = vsel %vm499, %v739, 0.0
    %v756 = vmul.f32 %v164, %v740
    %v757 = vmul.f32 %v165, %v741
    %v758 = vmul.f32 %v166, %v742
    %v759 = vmul.f32 %v167, %v743
    %v760 = vmul.f32 %v168, %v744
    %v761 = vmul.f32 %v169, %v745
    %v762 = vmul.f32 %v170, %v746
    %v763 = vmul.f32 %v171, %v747
    %v764 = vmul.f32 %v172, %v748
    %v765 = vmul.f32 %v173, %v749
    %v766 = vmul.f32 %v174, %v750
    %v767 = vmul.f32 %v175, %v751
    %v768 = vmul.f32 %v176, %v752
    %v769 = vmul.f32 %v177, %v753
    %v770 = vmul.f32 %v178, %v754
    %v771 = vmul.f32 %v179, %v755
    %v772 = vpack.c.bf16 %v757, %v756
    %v773 = vpack.c.bf16 %v759, %v758
    %v774 = vpack.c.bf16 %v761, %v760
    %v775 = vpack.c.bf16 %v763, %v762
    %v776 = vpack.c.bf16 %v765, %v764
    %v777 = vpack.c.bf16 %v767, %v766
    %v778 = vpack.c.bf16 %v769, %v768
    %v779 = vpack.c.bf16 %v771, %v770
    %v796 = vunpack.c.l.b16 %v84
    %v797 = vunpack.c.l.b16 %v85
    %v798 = vunpack.c.l.b16 %v86
    %v799 = vunpack.c.l.b16 %v87
    %v800 = vunpack.c.l.b16 %v88
    %v801 = vunpack.c.l.b16 %v89
    %v802 = vunpack.c.l.b16 %v90
    %v803 = vunpack.c.l.b16 %v91
    %v804 = vunpack.c.l.b16 %v92
    %v805 = vunpack.c.l.b16 %v93
    %v806 = vunpack.c.l.b16 %v94
    %v807 = vunpack.c.l.b16 %v95
    %v808 = vunpack.c.l.b16 %v96
    %v809 = vunpack.c.l.b16 %v97
    %v810 = vunpack.c.l.b16 %v98
    %v811 = vunpack.c.l.b16 %v99
    %v812 = vpack.c.b16 %v797, %v796
    %v813 = vpack.c.b16 %v799, %v798
    %v814 = vpack.c.b16 %v801, %v800
    %v815 = vpack.c.b16 %v803, %v802
    %v816 = vpack.c.b16 %v805, %v804
    %v817 = vpack.c.b16 %v807, %v806
    %v818 = vpack.c.b16 %v809, %v808
    %v819 = vpack.c.b16 %v811, %v810
    %828 = vmatpush.bf16.msra.mxu0 %v779
    %829 = vmatpush.bf16.msra.mxu0 %v778
    %830 = vmatpush.bf16.msra.mxu0 %v777
    %831 = vmatpush.bf16.msra.mxu0 %v776
    %832 = vmatpush.bf16.msra.mxu0 %v775
    %833 = vmatpush.bf16.msra.mxu0 %v774
    %834 = vmatpush.bf16.msra.mxu0 %v773
    %835 = vmatpush.bf16.msra.mxu0 %v772
    %836 = vmatmul.bf16.gmra.mxu0 %v812
    %v837 = vpop.f32.mrf.mxu0
    %v838 = vadd.f32 0.0, %v837
    %v839 = vpop.f32.mrf.mxu0
    %v840 = vadd.f32 0.0, %v839
    %841 = vmatmul.bf16.gmra.mxu0 %v813
    %v842 = vpop.f32.mrf.mxu0
    %v843 = vadd.f32 0.0, %v842
    %v844 = vpop.f32.mrf.mxu0
    %v845 = vadd.f32 0.0, %v844
    %846 = vmatmul.bf16.gmra.mxu0 %v814
    %v847 = vpop.f32.mrf.mxu0
    %v848 = vadd.f32 0.0, %v847
    %v849 = vpop.f32.mrf.mxu0
    %v850 = vadd.f32 0.0, %v849
    %851 = vmatmul.bf16.gmra.mxu0 %v815
    %v852 = vpop.f32.mrf.mxu0
    %v853 = vadd.f32 0.0, %v852
    %v854 = vpop.f32.mrf.mxu0
    %v855 = vadd.f32 0.0, %v854
    %856 = vmatmul.bf16.gmra.mxu0 %v816
    %v857 = vpop.f32.mrf.mxu0
    %v858 = vadd.f32 0.0, %v857
    %v859 = vpop.f32.mrf.mxu0
    %v860 = vadd.f32 0.0, %v859
    %861 = vmatmul.bf16.gmra.mxu0 %v817
    %v862 = vpop.f32.mrf.mxu0
    %v863 = vadd.f32 0.0, %v862
    %v864 = vpop.f32.mrf.mxu0
    %v865 = vadd.f32 0.0, %v864
    %866 = vmatmul.bf16.gmra.mxu0 %v818
    %v867 = vpop.f32.mrf.mxu0
    %v868 = vadd.f32 0.0, %v867
    %v869 = vpop.f32.mrf.mxu0
    %v870 = vadd.f32 0.0, %v869
    %871 = vmatmul.bf16.gmra.mxu0 %v819
    %v872 = vpop.f32.mrf.mxu0
    %v873 = vadd.f32 0.0, %v872
    %v874 = vpop.f32.mrf.mxu0
    %v875 = vadd.f32 0.0, %v874
    %876 = vdwg.mxu0
    %v877 = vpack.c.bf16 %v840, %v838
    %v878 = vpack.c.bf16 %v845, %v843
    %v879 = vpack.c.bf16 %v850, %v848
    %v880 = vpack.c.bf16 %v855, %v853
    %v881 = vpack.c.bf16 %v860, %v858
    %v882 = vpack.c.bf16 %v865, %v863
    %v883 = vpack.c.bf16 %v870, %v868
    %v884 = vpack.c.bf16 %v875, %v873
    %v885 = vld [vmem:[#allocation7] sm:$0xf]
    %v886 = vld [vmem:[#allocation7 + $0x4] sm:$0xf]
    %v887 = vld [vmem:[#allocation7 + $0x8] sm:$0xf]
    %v888 = vld [vmem:[#allocation7 + $0xc] sm:$0xf]
    %v889 = vld [vmem:[#allocation7 + $0x10] sm:$0xf]
    %v890 = vld [vmem:[#allocation7 + $0x14] sm:$0xf]
    %v891 = vld [vmem:[#allocation7 + $0x18] sm:$0xf]
    %v892 = vld [vmem:[#allocation7 + $0x1c] sm:$0xf]
    %v893 = vld [vmem:[#allocation7 + $0x20] sm:$0xf]
    %v894 = vld [vmem:[#allocation7 + $0x24] sm:$0xf]
    %v895 = vld [vmem:[#allocation7 + $0x28] sm:$0xf]
    %v896 = vld [vmem:[#allocation7 + $0x2c] sm:$0xf]
    %v897 = vld [vmem:[#allocation7 + $0x30] sm:$0xf]
    %v898 = vld [vmem:[#allocation7 + $0x34] sm:$0xf]
    %v899 = vld [vmem:[#allocation7 + $0x38] sm:$0xf]
    %v900 = vld [vmem:[#allocation7 + $0x3c] sm:$0xf]
    %v901 = vld [vmem:[#allocation8] sm:$0xf]
    %v902 = vld [vmem:[#allocation8 + $0x4] sm:$0xf]
    %v903 = vld [vmem:[#allocation8 + $0x8] sm:$0xf]
    %v904 = vld [vmem:[#allocation8 + $0xc] sm:$0xf]
    %v905 = vld [vmem:[#allocation8 + $0x10] sm:$0xf]
    %v906 = vld [vmem:[#allocation8 + $0x14] sm:$0xf]
    %v907 = vld [vmem:[#allocation8 + $0x18] sm:$0xf]
    %v908 = vld [vmem:[#allocation8 + $0x1c] sm:$0xf]
    %v909 = vld [vmem:[#allocation8 + $0x20] sm:$0xf]
    %v910 = vld [vmem:[#allocation8 + $0x24] sm:$0xf]
    %v911 = vld [vmem:[#allocation8 + $0x28] sm:$0xf]
    %v912 = vld [vmem:[#allocation8 + $0x2c] sm:$0xf]
    %v913 = vld [vmem:[#allocation8 + $0x30] sm:$0xf]
    %v914 = vld [vmem:[#allocation8 + $0x34] sm:$0xf]
    %v915 = vld [vmem:[#allocation8 + $0x38] sm:$0xf]
    %v916 = vld [vmem:[#allocation8 + $0x3c] sm:$0xf]
    %v917 = vld [vmem:[%s4] sm:$0x1]
    %v934 = vunpack.c.l.b16 %v885
    %v935 = vunpack.c.l.b16 %v886
    %v936 = vunpack.c.l.b16 %v887
    %v937 = vunpack.c.l.b16 %v888
    %v938 = vunpack.c.l.b16 %v889
    %v939 = vunpack.c.l.b16 %v890
    %v940 = vunpack.c.l.b16 %v891
    %v941 = vunpack.c.l.b16 %v892
    %v942 = vunpack.c.l.b16 %v893
    %v943 = vunpack.c.l.b16 %v894
    %v944 = vunpack.c.l.b16 %v895
    %v945 = vunpack.c.l.b16 %v896
    %v946 = vunpack.c.l.b16 %v897
    %v947 = vunpack.c.l.b16 %v898
    %v948 = vunpack.c.l.b16 %v899
    %v949 = vunpack.c.l.b16 %v900
    %v950 = vpack.c.b16 %v935, %v934
    %v951 = vpack.c.b16 %v937, %v936
    %v952 = vpack.c.b16 %v939, %v938
    %v953 = vpack.c.b16 %v941, %v940
    %v954 = vpack.c.b16 %v943, %v942
    %v955 = vpack.c.b16 %v945, %v944
    %v956 = vpack.c.b16 %v947, %v946
    %v957 = vpack.c.b16 %v949, %v948
    %v982 = vunpack.c.l.b16 %v901
    %v983 = vunpack.c.l.b16 %v902
    %v984 = vunpack.c.l.b16 %v903
    %v985 = vunpack.c.l.b16 %v904
    %v986 = vunpack.c.l.b16 %v905
    %v987 = vunpack.c.l.b16 %v906
    %v988 = vunpack.c.l.b16 %v907
    %v989 = vunpack.c.l.b16 %v908
    %v990 = vunpack.c.l.b16 %v909
    %v991 = vunpack.c.l.b16 %v910
    %v992 = vunpack.c.l.b16 %v911
    %v993 = vunpack.c.l.b16 %v912
    %v994 = vunpack.c.l.b16 %v913
    %v995 = vunpack.c.l.b16 %v914
    %v996 = vunpack.c.l.b16 %v915
    %v997 = vunpack.c.l.b16 %v916
    %v998 = vpack.c.b16 %v983, %v982
    %v999 = vpack.c.b16 %v985, %v984
    %v1000 = vpack.c.b16 %v987, %v986
    %v1001 = vpack.c.b16 %v989, %v988
    %v1002 = vpack.c.b16 %v991, %v990
    %v1003 = vpack.c.b16 %v993, %v992
    %v1004 = vpack.c.b16 %v995, %v994
    %v1005 = vpack.c.b16 %v997, %v996
    %1014 = vmatpush.bf16.msra.mxu0 %v1005
    %1015 = vmatpush.bf16.msra.mxu0 %v1004
    %1016 = vmatpush.bf16.msra.mxu0 %v1003
    %1017 = vmatpush.bf16.msra.mxu0 %v1002
    %1018 = vmatpush.bf16.msra.mxu0 %v1001
    %1019 = vmatpush.bf16.msra.mxu0 %v1000
    %1020 = vmatpush.bf16.msra.mxu0 %v999
    %1021 = vmatpush.bf16.msra.mxu0 %v998
    %1022 = vmatmul.bf16.gmra.mxu0 %v950
    %v1023 = vpop.f32.mrf.mxu0
    %v1024 = vadd.f32 0.0, %v1023
    %v1025 = vpop.f32.mrf.mxu0
    %v1026 = vadd.f32 0.0, %v1025
    %1027 = vmatmul.bf16.gmra.mxu0 %v951
    %v1028 = vpop.f32.mrf.mxu0
    %v1029 = vadd.f32 0.0, %v1028
    %v1030 = vpop.f32.mrf.mxu0
    %v1031 = vadd.f32 0.0, %v1030
    %1032 = vmatmul.bf16.gmra.mxu0 %v952
    %v1033 = vpop.f32.mrf.mxu0
    %v1034 = vadd.f32 0.0, %v1033
    %v1035 = vpop.f32.mrf.mxu0
    %v1036 = vadd.f32 0.0, %v1035
    %1037 = vmatmul.bf16.gmra.mxu0 %v953
    %v1038 = vpop.f32.mrf.mxu0
    %v1039 = vadd.f32 0.0, %v1038
    %v1040 = vpop.f32.mrf.mxu0
    %v1041 = vadd.f32 0.0, %v1040
    %1042 = vmatmul.bf16.gmra.mxu0 %v954
    %v1043 = vpop.f32.mrf.mxu0
    %v1044 = vadd.f32 0.0, %v1043
    %v1045 = vpop.f32.mrf.mxu0
    %v1046 = vadd.f32 0.0, %v1045
    %1047 = vmatmul.bf16.gmra.mxu0 %v955
    %v1048 = vpop.f32.mrf.mxu0
    %v1049 = vadd.f32 0.0, %v1048
    %v1050 = vpop.f32.mrf.mxu0
    %v1051 = vadd.f32 0.0, %v1050
    %1052 = vmatmul.bf16.gmra.mxu0 %v956
    %v1053 = vpop.f32.mrf.mxu0
    %v1054 = vadd.f32 0.0, %v1053
    %v1055 = vpop.f32.mrf.mxu0
    %v1056 = vadd.f32 0.0, %v1055
    %1057 = vmatmul.bf16.gmra.mxu0 %v957
    %v1058 = vpop.f32.mrf.mxu0
    %v1059 = vadd.f32 0.0, %v1058
    %v1060 = vpop.f32.mrf.mxu0
    %v1061 = vadd.f32 0.0, %v1060
    %1062 = vdwg.mxu0
    %v1063 = vpack.c.bf16 %v1026, %v1024
    %v1064 = vpack.c.bf16 %v1031, %v1029
    %v1065 = vpack.c.bf16 %v1036, %v1034
    %v1066 = vpack.c.bf16 %v1041, %v1039
    %v1067 = vpack.c.bf16 %v1046, %v1044
    %v1068 = vpack.c.bf16 %v1051, %v1049
    %v1069 = vpack.c.bf16 %v1056, %v1054
    %v1070 = vpack.c.bf16 %v1061, %v1059
    %1071 = vmatpush.bf16.msra.mxu0 %v1070
    %1072 = vmatpush.bf16.msra.mxu0 %v1069
    %1073 = vmatpush.bf16.msra.mxu0 %v1068
    %1074 = vmatpush.bf16.msra.mxu0 %v1067
    %1075 = vmatpush.bf16.msra.mxu0 %v1066
    %1076 = vmatpush.bf16.msra.mxu0 %v1065
    %1077 = vmatpush.bf16.msra.mxu0 %v1064
    %1078 = vmatpush.bf16.msra.mxu0 %v1063
    %1079 = vmatmul.bf16.gmra.mxu0 %v877
    %v1080 = vpop.f32.mrf.mxu0
    %v1081 = vadd.f32 0.0, %v1080
    %v1082 = vpop.f32.mrf.mxu0
    %v1083 = vadd.f32 0.0, %v1082
    %1084 = vmatmul.bf16.gmra.mxu0 %v878
    %v1085 = vpop.f32.mrf.mxu0
    %v1086 = vadd.f32 0.0, %v1085
    %v1087 = vpop.f32.mrf.mxu0
    %v1088 = vadd.f32 0.0, %v1087
    %1089 = vmatmul.bf16.gmra.mxu0 %v879
    %v1090 = vpop.f32.mrf.mxu0
    %v1091 = vadd.f32 0.0, %v1090
    %v1092 = vpop.f32.mrf.mxu0
    %v1093 = vadd.f32 0.0, %v1092
    %1094 = vmatmul.bf16.gmra.mxu0 %v880
    %v1095 = vpop.f32.mrf.mxu0
    %v1096 = vadd.f32 0.0, %v1095
    %v1097 = vpop.f32.mrf.mxu0
    %v1098 = vadd.f32 0.0, %v1097
    %1099 = vmatmul.bf16.gmra.mxu0 %v881
    %v1100 = vpop.f32.mrf.mxu0
    %v1101 = vadd.f32 0.0, %v1100
    %v1102 = vpop.f32.mrf.mxu0
    %v1103 = vadd.f32 0.0, %v1102
    %1104 = vmatmul.bf16.gmra.mxu0 %v882
    %v1105 = vpop.f32.mrf.mxu0
    %v1106 = vadd.f32 0.0, %v1105
    %v1107 = vpop.f32.mrf.mxu0
    %v1108 = vadd.f32 0.0, %v1107
    %1109 = vmatmul.bf16.gmra.mxu0 %v883
    %v1110 = vpop.f32.mrf.mxu0
    %v1111 = vadd.f32 0.0, %v1110
    %v1112 = vpop.f32.mrf.mxu0
    %v1113 = vadd.f32 0.0, %v1112
    %1114 = vmatmul.bf16.gmra.mxu0 %v884
    %v1115 = vpop.f32.mrf.mxu0
    %v1116 = vadd.f32 0.0, %v1115
    %v1117 = vpop.f32.mrf.mxu0
    %v1118 = vadd.f32 0.0, %v1117
    %1119 = vdwg.mxu0
    %v1120 = vmul.f32 %v468, %v1081
    %v1121 = vmul.f32 %v469, %v1083
    %v1122 = vmul.f32 %v470, %v1086
    %v1123 = vmul.f32 %v471, %v1088
    %v1124 = vmul.f32 %v472, %v1091
    %v1125 = vmul.f32 %v473, %v1093
    %v1126 = vmul.f32 %v474, %v1096
    %v1127 = vmul.f32 %v475, %v1098
    %v1128 = vmul.f32 %v476, %v1101
    %v1129 = vmul.f32 %v477, %v1103
    %v1130 = vmul.f32 %v478, %v1106
    %v1131 = vmul.f32 %v479, %v1108
    %v1132 = vmul.f32 %v480, %v1111
    %v1133 = vmul.f32 %v481, %v1113
    %v1134 = vmul.f32 %v482, %v1116
    %v1135 = vmul.f32 %v483, %v1118
    %v1137 = vperm.slane %v917, 0
    %v1139 = vadd.f32 %v1120, %v1137
    %v1140 = vadd.f32 %v1121, %v1137
    %v1141 = vadd.f32 %v1122, %v1137
    %v1142 = vadd.f32 %v1123, %v1137
    %v1143 = vadd.f32 %v1124, %v1137
    %v1144 = vadd.f32 %v1125, %v1137
    %v1145 = vadd.f32 %v1126, %v1137
    %v1146 = vadd.f32 %v1127, %v1137
    %v1147 = vadd.f32 %v1128, %v1137
    %v1148 = vadd.f32 %v1129, %v1137
    %v1149 = vadd.f32 %v1130, %v1137
    %v1150 = vadd.f32 %v1131, %v1137
    %v1151 = vadd.f32 %v1132, %v1137
    %v1152 = vadd.f32 %v1133, %v1137
    %v1153 = vadd.f32 %v1134, %v1137
    %v1154 = vadd.f32 %v1135, %v1137
    %v1155 = vmax.f32 %v1139, 0.0
    %v1156 = vmax.f32 %v1140, 0.0
    %v1157 = vmax.f32 %v1141, 0.0
    %v1158 = vmax.f32 %v1142, 0.0
    %v1159 = vmax.f32 %v1143, 0.0
    %v1160 = vmax.f32 %v1144, 0.0
    %v1161 = vmax.f32 %v1145, 0.0
    %v1162 = vmax.f32 %v1146, 0.0
    %v1163 = vmax.f32 %v1147, 0.0
    %v1164 = vmax.f32 %v1148, 0.0
    %v1165 = vmax.f32 %v1149, 0.0
    %v1166 = vmax.f32 %v1150, 0.0
    %v1167 = vmax.f32 %v1151, 0.0
    %v1168 = vmax.f32 %v1152, 0.0
    %v1169 = vmax.f32 %v1153, 0.0
    %v1170 = vmax.f32 %v1154, 0.0
    %v1171 = vpack.c.bf16 %v1156, %v1155
    %v1172 = vpack.c.bf16 %v1158, %v1157
    %v1173 = vpack.c.bf16 %v1160, %v1159
    %v1174 = vpack.c.bf16 %v1162, %v1161
    %v1175 = vpack.c.bf16 %v1164, %v1163
    %v1176 = vpack.c.bf16 %v1166, %v1165
    %v1177 = vpack.c.bf16 %v1168, %v1167
    %v1178 = vpack.c.bf16 %v1170, %v1169
    %s1179 = scalar_lea.vmem [#allocation8], 64
    %v1180 = vld [vmem:[%s1179] sm:$0xf]
    %v1181 = vld [vmem:[%s1179 + $0x4] sm:$0xf]
    %v1182 = vld [vmem:[%s1179 + $0x8] sm:$0xf]
    %v1183 = vld [vmem:[%s1179 + $0xc] sm:$0xf]
    %v1184 = vld [vmem:[%s1179 + $0x10] sm:$0xf]
    %v1185 = vld [vmem:[%s1179 + $0x14] sm:$0xf]
    %v1186 = vld [vmem:[%s1179 + $0x18] sm:$0xf]
    %v1187 = vld [vmem:[%s1179 + $0x1c] sm:$0xf]
    %v1188 = vld [vmem:[%s1179 + $0x20] sm:$0xf]
    %v1189 = vld [vmem:[%s1179 + $0x24] sm:$0xf]
    %v1190 = vld [vmem:[%s1179 + $0x28] sm:$0xf]
    %v1191 = vld [vmem:[%s1179 + $0x2c] sm:$0xf]
    %v1192 = vld [vmem:[%s1179 + $0x30] sm:$0xf]
    %v1193 = vld [vmem:[%s1179 + $0x34] sm:$0xf]
    %v1194 = vld [vmem:[%s1179 + $0x38] sm:$0xf]
    %v1195 = vld [vmem:[%s1179 + $0x3c] sm:$0xf]
    %s1196 = scalar_lea.vmem %s4, 1
    %v1197 = vld [vmem:[%s1196] sm:$0x1]
    %v1214 = vunpack.c.l.b16 %v1180
    %v1215 = vunpack.c.l.b16 %v1181
    %v1216 = vunpack.c.l.b16 %v1182
    %v1217 = vunpack.c.l.b16 %v1183
    %v1218 = vunpack.c.l.b16 %v1184
    %v1219 = vunpack.c.l.b16 %v1185
    %v1220 = vunpack.c.l.b16 %v1186
    %v1221 = vunpack.c.l.b16 %v1187
    %v1222 = vunpack.c.l.b16 %v1188
    %v1223 = vunpack.c.l.b16 %v1189
    %v1224 = vunpack.c.l.b16 %v1190
    %v1225 = vunpack.c.l.b16 %v1191
    %v1226 = vunpack.c.l.b16 %v1192
    %v1227 = vunpack.c.l.b16 %v1193
    %v1228 = vunpack.c.l.b16 %v1194
    %v1229 = vunpack.c.l.b16 %v1195
    %v1230 = vpack.c.b16 %v1215, %v1214
    %v1231 = vpack.c.b16 %v1217, %v1216
    %v1232 = vpack.c.b16 %v1219, %v1218
    %v1233 = vpack.c.b16 %v1221, %v1220
    %v1234 = vpack.c.b16 %v1223, %v1222
    %v1235 = vpack.c.b16 %v1225, %v1224
    %v1236 = vpack.c.b16 %v1227, %v1226
    %v1237 = vpack.c.b16 %v1229, %v1228
    %1246 = vmatpush.bf16.msra.mxu0 %v1237
    %1247 = vmatpush.bf16.msra.mxu0 %v1236
    %1248 = vmatpush.bf16.msra.mxu0 %v1235
    %1249 = vmatpush.bf16.msra.mxu0 %v1234
    %1250 = vmatpush.bf16.msra.mxu0 %v1233
    %1251 = vmatpush.bf16.msra.mxu0 %v1232
    %1252 = vmatpush.bf16.msra.mxu0 %v1231
    %1253 = vmatpush.bf16.msra.mxu0 %v1230
    %1254 = vmatmul.bf16.gmra.mxu0 %v1171
    %v1255 = vpop.f32.mrf.mxu0
    %v1256 = vadd.f32 0.0, %v1255
    %v1257 = vpop.f32.mrf.mxu0
    %v1258 = vadd.f32 0.0, %v1257
    %1259 = vmatmul.bf16.gmra.mxu0 %v1172
    %v1260 = vpop.f32.mrf.mxu0
    %v1261 = vadd.f32 0.0, %v1260
    %v1262 = vpop.f32.mrf.mxu0
    %v1263 = vadd.f32 0.0, %v1262
    %1264 = vmatmul.bf16.gmra.mxu0 %v1173
    %v1265 = vpop.f32.mrf.mxu0
    %v1266 = vadd.f32 0.0, %v1265
    %v1267 = vpop.f32.mrf.mxu0
    %v1268 = vadd.f32 0.0, %v1267
    %1269 = vmatmul.bf16.gmra.mxu0 %v1174
    %v1270 = vpop.f32.mrf.mxu0
    %v1271 = vadd.f32 0.0, %v1270
    %v1272 = vpop.f32.mrf.mxu0
    %v1273 = vadd.f32 0.0, %v1272
    %1274 = vmatmul.bf16.gmra.mxu0 %v1175
    %v1275 = vpop.f32.mrf.mxu0
    %v1276 = vadd.f32 0.0, %v1275
    %v1277 = vpop.f32.mrf.mxu0
    %v1278 = vadd.f32 0.0, %v1277
    %1279 = vmatmul.bf16.gmra.mxu0 %v1176
    %v1280 = vpop.f32.mrf.mxu0
    %v1281 = vadd.f32 0.0, %v1280
    %v1282 = vpop.f32.mrf.mxu0
    %v1283 = vadd.f32 0.0, %v1282
    %1284 = vmatmul.bf16.gmra.mxu0 %v1177
    %v1285 = vpop.f32.mrf.mxu0
    %v1286 = vadd.f32 0.0, %v1285
    %v1287 = vpop.f32.mrf.mxu0
    %v1288 = vadd.f32 0.0, %v1287
    %1289 = vmatmul.bf16.gmra.mxu0 %v1178
    %v1290 = vpop.f32.mrf.mxu0
    %v1291 = vadd.f32 0.0, %v1290
    %v1292 = vpop.f32.mrf.mxu0
    %v1293 = vadd.f32 0.0, %v1292
    %1294 = vdwg.mxu0
    %v1295 = vpack.c.bf16 %v1258, %v1256
    %v1296 = vpack.c.bf16 %v1263, %v1261
    %v1297 = vpack.c.bf16 %v1268, %v1266
    %v1298 = vpack.c.bf16 %v1273, %v1271
    %v1299 = vpack.c.bf16 %v1278, %v1276
    %v1300 = vpack.c.bf16 %v1283, %v1281
    %v1301 = vpack.c.bf16 %v1288, %v1286
    %v1302 = vpack.c.bf16 %v1293, %v1291
    %1303 = vmatpush.bf16.msra.mxu0 %v1302
    %1304 = vmatpush.bf16.msra.mxu0 %v1301
    %1305 = vmatpush.bf16.msra.mxu0 %v1300
    %1306 = vmatpush.bf16.msra.mxu0 %v1299
    %1307 = vmatpush.bf16.msra.mxu0 %v1298
    %1308 = vmatpush.bf16.msra.mxu0 %v1297
    %1309 = vmatpush.bf16.msra.mxu0 %v1296
    %1310 = vmatpush.bf16.msra.mxu0 %v1295
    %1311 = vmatmul.bf16.gmra.mxu0 %v877
    %v1312 = vpop.f32.mrf.mxu0
    %v1313 = vadd.f32 0.0, %v1312
    %v1314 = vpop.f32.mrf.mxu0
    %v1315 = vadd.f32 0.0, %v1314
    %1316 = vmatmul.bf16.gmra.mxu0 %v878
    %v1317 = vpop.f32.mrf.mxu0
    %v1318 = vadd.f32 0.0, %v1317
    %v1319 = vpop.f32.mrf.mxu0
    %v1320 = vadd.f32 0.0, %v1319
    %1321 = vmatmul.bf16.gmra.mxu0 %v879
    %v1322 = vpop.f32.mrf.mxu0
    %v1323 = vadd.f32 0.0, %v1322
    %v1324 = vpop.f32.mrf.mxu0
    %v1325 = vadd.f32 0.0, %v1324
    %1326 = vmatmul.bf16.gmra.mxu0 %v880
    %v1327 = vpop.f32.mrf.mxu0
    %v1328 = vadd.f32 0.0, %v1327
    %v1329 = vpop.f32.mrf.mxu0
    %v1330 = vadd.f32 0.0, %v1329
    %1331 = vmatmul.bf16.gmra.mxu0 %v881
    %v1332 = vpop.f32.mrf.mxu0
    %v1333 = vadd.f32 0.0, %v1332
    %v1334 = vpop.f32.mrf.mxu0
    %v1335 = vadd.f32 0.0, %v1334
    %1336 = vmatmul.bf16.gmra.mxu0 %v882
    %v1337 = vpop.f32.mrf.mxu0
    %v1338 = vadd.f32 0.0, %v1337
    %v1339 = vpop.f32.mrf.mxu0
    %v1340 = vadd.f32 0.0, %v1339
    %1341 = vmatmul.bf16.gmra.mxu0 %v883
    %v1342 = vpop.f32.mrf.mxu0
    %v1343 = vadd.f32 0.0, %v1342
    %v1344 = vpop.f32.mrf.mxu0
    %v1345 = vadd.f32 0.0, %v1344
    %1346 = vmatmul.bf16.gmra.mxu0 %v884
    %v1347 = vpop.f32.mrf.mxu0
    %v1348 = vadd.f32 0.0, %v1347
    %v1349 = vpop.f32.mrf.mxu0
    %v1350 = vadd.f32 0.0, %v1349
    %1351 = vdwg.mxu0
    %v1352 = vmul.f32 %v468, %v1313
    %v1353 = vmul.f32 %v469, %v1315
    %v1354 = vmul.f32 %v470, %v1318
    %v1355 = vmul.f32 %v471, %v1320
    %v1356 = vmul.f32 %v472, %v1323
    %v1357 = vmul.f32 %v473, %v1325
    %v1358 = vmul.f32 %v474, %v1328
    %v1359 = vmul.f32 %v475, %v1330
    %v1360 = vmul.f32 %v476, %v1333
    %v1361 = vmul.f32 %v477, %v1335
    %v1362 = vmul.f32 %v478, %v1338
    %v1363 = vmul.f32 %v479, %v1340
    %v1364 = vmul.f32 %v480, %v1343
    %v1365 = vmul.f32 %v481, %v1345
    %v1366 = vmul.f32 %v482, %v1348
    %v1367 = vmul.f32 %v483, %v1350
    %v1369 = vperm.slane %v1197, 0
    %v1371 = vadd.f32 %v1352, %v1369
    %v1372 = vadd.f32 %v1353, %v1369
    %v1373 = vadd.f32 %v1354, %v1369
    %v1374 = vadd.f32 %v1355, %v1369
    %v1375 = vadd.f32 %v1356, %v1369
    %v1376 = vadd.f32 %v1357, %v1369
    %v1377 = vadd.f32 %v1358, %v1369
    %v1378 = vadd.f32 %v1359, %v1369
    %v1379 = vadd.f32 %v1360, %v1369
    %v1380 = vadd.f32 %v1361, %v1369
    %v1381 = vadd.f32 %v1362, %v1369
    %v1382 = vadd.f32 %v1363, %v1369
    %v1383 = vadd.f32 %v1364, %v1369
    %v1384 = vadd.f32 %v1365, %v1369
    %v1385 = vadd.f32 %v1366, %v1369
    %v1386 = vadd.f32 %v1367, %v1369
    %v1387 = vmax.f32 %v1371, 0.0
    %v1388 = vmax.f32 %v1372, 0.0
    %v1389 = vmax.f32 %v1373, 0.0
    %v1390 = vmax.f32 %v1374, 0.0
    %v1391 = vmax.f32 %v1375, 0.0
    %v1392 = vmax.f32 %v1376, 0.0
    %v1393 = vmax.f32 %v1377, 0.0
    %v1394 = vmax.f32 %v1378, 0.0
    %v1395 = vmax.f32 %v1379, 0.0
    %v1396 = vmax.f32 %v1380, 0.0
    %v1397 = vmax.f32 %v1381, 0.0
    %v1398 = vmax.f32 %v1382, 0.0
    %v1399 = vmax.f32 %v1383, 0.0
    %v1400 = vmax.f32 %v1384, 0.0
    %v1401 = vmax.f32 %v1385, 0.0
    %v1402 = vmax.f32 %v1386, 0.0
    %v1403 = vpack.c.bf16 %v1388, %v1387
    %v1404 = vpack.c.bf16 %v1390, %v1389
    %v1405 = vpack.c.bf16 %v1392, %v1391
    %v1406 = vpack.c.bf16 %v1394, %v1393
    %v1407 = vpack.c.bf16 %v1396, %v1395
    %v1408 = vpack.c.bf16 %v1398, %v1397
    %v1409 = vpack.c.bf16 %v1400, %v1399
    %v1410 = vpack.c.bf16 %v1402, %v1401
    %s1411 = scalar_lea.vmem [#allocation8], 128
    %v1412 = vld [vmem:[%s1411] sm:$0xf]
    %v1413 = vld [vmem:[%s1411 + $0x4] sm:$0xf]
    %v1414 = vld [vmem:[%s1411 + $0x8] sm:$0xf]
    %v1415 = vld [vmem:[%s1411 + $0xc] sm:$0xf]
    %v1416 = vld [vmem:[%s1411 + $0x10] sm:$0xf]
    %v1417 = vld [vmem:[%s1411 + $0x14] sm:$0xf]
    %v1418 = vld [vmem:[%s1411 + $0x18] sm:$0xf]
    %v1419 = vld [vmem:[%s1411 + $0x1c] sm:$0xf]
    %v1420 = vld [vmem:[%s1411 + $0x20] sm:$0xf]
    %v1421 = vld [vmem:[%s1411 + $0x24] sm:$0xf]
    %v1422 = vld [vmem:[%s1411 + $0x28] sm:$0xf]
    %v1423 = vld [vmem:[%s1411 + $0x2c] sm:$0xf]
    %v1424 = vld [vmem:[%s1411 + $0x30] sm:$0xf]
    %v1425 = vld [vmem:[%s1411 + $0x34] sm:$0xf]
    %v1426 = vld [vmem:[%s1411 + $0x38] sm:$0xf]
    %v1427 = vld [vmem:[%s1411 + $0x3c] sm:$0xf]
    %s1428 = scalar_lea.vmem %s4, 2
    %v1429 = vld [vmem:[%s1428] sm:$0x1]
    %v1446 = vunpack.c.l.b16 %v1412
    %v1447 = vunpack.c.l.b16 %v1413
    %v1448 = vunpack.c.l.b16 %v1414
    %v1449 = vunpack.c.l.b16 %v1415
    %v1450 = vunpack.c.l.b16 %v1416
    %v1451 = vunpack.c.l.b16 %v1417
    %v1452 = vunpack.c.l.b16 %v1418
    %v1453 = vunpack.c.l.b16 %v1419
    %v1454 = vunpack.c.l.b16 %v1420
    %v1455 = vunpack.c.l.b16 %v1421
    %v1456 = vunpack.c.l.b16 %v1422
    %v1457 = vunpack.c.l.b16 %v1423
    %v1458 = vunpack.c.l.b16 %v1424
    %v1459 = vunpack.c.l.b16 %v1425
    %v1460 = vunpack.c.l.b16 %v1426
    %v1461 = vunpack.c.l.b16 %v1427
    %v1462 = vpack.c.b16 %v1447, %v1446
    %v1463 = vpack.c.b16 %v1449, %v1448
    %v1464 = vpack.c.b16 %v1451, %v1450
    %v1465 = vpack.c.b16 %v1453, %v1452
    %v1466 = vpack.c.b16 %v1455, %v1454
    %v1467 = vpack.c.b16 %v1457, %v1456
    %v1468 = vpack.c.b16 %v1459, %v1458
    %v1469 = vpack.c.b16 %v1461, %v1460
    %1478 = vmatpush.bf16.msra.mxu0 %v1469
    %1479 = vmatpush.bf16.msra.mxu0 %v1468
    %1480 = vmatpush.bf16.msra.mxu0 %v1467
    %1481 = vmatpush.bf16.msra.mxu0 %v1466
    %1482 = vmatpush.bf16.msra.mxu0 %v1465
    %1483 = vmatpush.bf16.msra.mxu0 %v1464
    %1484 = vmatpush.bf16.msra.mxu0 %v1463
    %1485 = vmatpush.bf16.msra.mxu0 %v1462
    %1486 = vmatmul.bf16.gmra.mxu0 %v1403
    %v1487 = vpop.f32.mrf.mxu0
    %v1488 = vadd.f32 0.0, %v1487
    %v1489 = vpop.f32.mrf.mxu0
    %v1490 = vadd.f32 0.0, %v1489
    %1491 = vmatmul.bf16.gmra.mxu0 %v1404
    %v1492 = vpop.f32.mrf.mxu0
    %v1493 = vadd.f32 0.0, %v1492
    %v1494 = vpop.f32.mrf.mxu0
    %v1495 = vadd.f32 0.0, %v1494
    %1496 = vmatmul.bf16.gmra.mxu0 %v1405
    %v1497 = vpop.f32.mrf.mxu0
    %v1498 = vadd.f32 0.0, %v1497
    %v1499 = vpop.f32.mrf.mxu0
    %v1500 = vadd.f32 0.0, %v1499
    %1501 = vmatmul.bf16.gmra.mxu0 %v1406
    %v1502 = vpop.f32.mrf.mxu0
    %v1503 = vadd.f32 0.0, %v1502
    %v1504 = vpop.f32.mrf.mxu0
    %v1505 = vadd.f32 0.0, %v1504
    %1506 = vmatmul.bf16.gmra.mxu0 %v1407
    %v1507 = vpop.f32.mrf.mxu0
    %v1508 = vadd.f32 0.0, %v1507
    %v1509 = vpop.f32.mrf.mxu0
    %v1510 = vadd.f32 0.0, %v1509
    %1511 = vmatmul.bf16.gmra.mxu0 %v1408
    %v1512 = vpop.f32.mrf.mxu0
    %v1513 = vadd.f32 0.0, %v1512
    %v1514 = vpop.f32.mrf.mxu0
    %v1515 = vadd.f32 0.0, %v1514
    %1516 = vmatmul.bf16.gmra.mxu0 %v1409
    %v1517 = vpop.f32.mrf.mxu0
    %v1518 = vadd.f32 0.0, %v1517
    %v1519 = vpop.f32.mrf.mxu0
    %v1520 = vadd.f32 0.0, %v1519
    %1521 = vmatmul.bf16.gmra.mxu0 %v1410
    %v1522 = vpop.f32.mrf.mxu0
    %v1523 = vadd.f32 0.0, %v1522
    %v1524 = vpop.f32.mrf.mxu0
    %v1525 = vadd.f32 0.0, %v1524
    %1526 = vdwg.mxu0
    %v1527 = vpack.c.bf16 %v1490, %v1488
    %v1528 = vpack.c.bf16 %v1495, %v1493
    %v1529 = vpack.c.bf16 %v1500, %v1498
    %v1530 = vpack.c.bf16 %v1505, %v1503
    %v1531 = vpack.c.bf16 %v1510, %v1508
    %v1532 = vpack.c.bf16 %v1515, %v1513
    %v1533 = vpack.c.bf16 %v1520, %v1518
    %v1534 = vpack.c.bf16 %v1525, %v1523
    %1535 = vmatpush.bf16.msra.mxu0 %v1534
    %1536 = vmatpush.bf16.msra.mxu0 %v1533
    %1537 = vmatpush.bf16.msra.mxu0 %v1532
    %1538 = vmatpush.bf16.msra.mxu0 %v1531
    %1539 = vmatpush.bf16.msra.mxu0 %v1530
    %1540 = vmatpush.bf16.msra.mxu0 %v1529
    %1541 = vmatpush.bf16.msra.mxu0 %v1528
    %1542 = vmatpush.bf16.msra.mxu0 %v1527
    %1543 = vmatmul.bf16.gmra.mxu0 %v877
    %v1544 = vpop.f32.mrf.mxu0
    %v1545 = vadd.f32 0.0, %v1544
    %v1546 = vpop.f32.mrf.mxu0
    %v1547 = vadd.f32 0.0, %v1546
    %1548 = vmatmul.bf16.gmra.mxu0 %v878
    %v1549 = vpop.f32.mrf.mxu0
    %v1550 = vadd.f32 0.0, %v1549
    %v1551 = vpop.f32.mrf.mxu0
    %v1552 = vadd.f32 0.0, %v1551
    %1553 = vmatmul.bf16.gmra.mxu0 %v879
    %v1554 = vpop.f32.mrf.mxu0
    %v1555 = vadd.f32 0.0, %v1554
    %v1556 = vpop.f32.mrf.mxu0
    %v1557 = vadd.f32 0.0, %v1556
    %1558 = vmatmul.bf16.gmra.mxu0 %v880
    %v1559 = vpop.f32.mrf.mxu0
    %v1560 = vadd.f32 0.0, %v1559
    %v1561 = vpop.f32.mrf.mxu0
    %v1562 = vadd.f32 0.0, %v1561
    %1563 = vmatmul.bf16.gmra.mxu0 %v881
    %v1564 = vpop.f32.mrf.mxu0
    %v1565 = vadd.f32 0.0, %v1564
    %v1566 = vpop.f32.mrf.mxu0
    %v1567 = vadd.f32 0.0, %v1566
    %1568 = vmatmul.bf16.gmra.mxu0 %v882
    %v1569 = vpop.f32.mrf.mxu0
    %v1570 = vadd.f32 0.0, %v1569
    %v1571 = vpop.f32.mrf.mxu0
    %v1572 = vadd.f32 0.0, %v1571
    %1573 = vmatmul.bf16.gmra.mxu0 %v883
    %v1574 = vpop.f32.mrf.mxu0
    %v1575 = vadd.f32 0.0, %v1574
    %v1576 = vpop.f32.mrf.mxu0
    %v1577 = vadd.f32 0.0, %v1576
    %1578 = vmatmul.bf16.gmra.mxu0 %v884
    %v1579 = vpop.f32.mrf.mxu0
    %v1580 = vadd.f32 0.0, %v1579
    %v1581 = vpop.f32.mrf.mxu0
    %v1582 = vadd.f32 0.0, %v1581
    %1583 = vdwg.mxu0
    %v1584 = vmul.f32 %v468, %v1545
    %v1585 = vmul.f32 %v469, %v1547
    %v1586 = vmul.f32 %v470, %v1550
    %v1587 = vmul.f32 %v471, %v1552
    %v1588 = vmul.f32 %v472, %v1555
    %v1589 = vmul.f32 %v473, %v1557
    %v1590 = vmul.f32 %v474, %v1560
    %v1591 = vmul.f32 %v475, %v1562
    %v1592 = vmul.f32 %v476, %v1565
    %v1593 = vmul.f32 %v477, %v1567
    %v1594 = vmul.f32 %v478, %v1570
    %v1595 = vmul.f32 %v479, %v1572
    %v1596 = vmul.f32 %v480, %v1575
    %v1597 = vmul.f32 %v481, %v1577
    %v1598 = vmul.f32 %v482, %v1580
    %v1599 = vmul.f32 %v483, %v1582
    %v1601 = vperm.slane %v1429, 0
    %v1603 = vadd.f32 %v1584, %v1601
    %v1604 = vadd.f32 %v1585, %v1601
    %v1605 = vadd.f32 %v1586, %v1601
    %v1606 = vadd.f32 %v1587, %v1601
    %v1607 = vadd.f32 %v1588, %v1601
    %v1608 = vadd.f32 %v1589, %v1601
    %v1609 = vadd.f32 %v1590, %v1601
    %v1610 = vadd.f32 %v1591, %v1601
    %v1611 = vadd.f32 %v1592, %v1601
    %v1612 = vadd.f32 %v1593, %v1601
    %v1613 = vadd.f32 %v1594, %v1601
    %v1614 = vadd.f32 %v1595, %v1601
    %v1615 = vadd.f32 %v1596, %v1601
    %v1616 = vadd.f32 %v1597, %v1601
    %v1617 = vadd.f32 %v1598, %v1601
    %v1618 = vadd.f32 %v1599, %v1601
    %1619 = vst [vmem:[#allocation10] sm:$0xff] %v1603
    %1620 = vst [vmem:[#allocation10 + $0x8] sm:$0xff] %v1604
    %1621 = vst [vmem:[#allocation10 + $0x10] sm:$0xff] %v1605
    %1622 = vst [vmem:[#allocation10 + $0x18] sm:$0xff] %v1606
    %1623 = vst [vmem:[#allocation10 + $0x20] sm:$0xff] %v1607
    %1624 = vst [vmem:[#allocation10 + $0x28] sm:$0xff] %v1608
    %1625 = vst [vmem:[#allocation10 + $0x30] sm:$0xff] %v1609
    %1626 = vst [vmem:[#allocation10 + $0x38] sm:$0xff] %v1610
    %1627 = vst [vmem:[#allocation10 + $0x40] sm:$0xff] %v1611
    %1628 = vst [vmem:[#allocation10 + $0x48] sm:$0xff] %v1612
    %1629 = vst [vmem:[#allocation10 + $0x50] sm:$0xff] %v1613
    %1630 = vst [vmem:[#allocation10 + $0x58] sm:$0xff] %v1614
    %1631 = vst [vmem:[#allocation10 + $0x60] sm:$0xff] %v1615
    %1632 = vst [vmem:[#allocation10 + $0x68] sm:$0xff] %v1616
    %1633 = vst [vmem:[#allocation10 + $0x70] sm:$0xff] %v1617
    %1634 = vst [vmem:[#allocation10 + $0x78] sm:$0xff] %v1618
    // Predicated region
    $region38: #{tpu_custom_call.1} parent=1 // pred_check
      _
    $region39: #{tpu_custom_call.1} parent=1 // pred_check_branch
      %1636 = sbr.rel (0) target = $region41
    $region40: #{tpu_custom_call.1} parent=1 // pred_region
      %1638 = vsyncadd [#allocation4], 0
      %s1639 = sshll.u32 [#allocation10], 4
      %s1640 = int_to_ptr.vmem [resolvable:$true] %s1639
      %s1641 = sshll.u32 %s5, 4
      %s1642 = int_to_ptr.hbm [resolvable:$true] %s1641
      %1647 = dma.vmem_to_hbm [thread:$0]  %s1640, 2048, %s1642, [#allocation4], 128, 128, 8
    $region41: #{tpu_custom_call.1} parent=1 // pred_fallthru
      _
    // Predicated region
    $region42: #{tpu_custom_call.1} parent=1 // pred_check
      _
    $region43: #{tpu_custom_call.1} parent=1 // pred_check_branch
      %1649 = sbr.rel (0) target = $region45
    $region44: #{tpu_custom_call.1} parent=1 // pred_region
      %1651 = dma.done [#allocation4], 2048
    $region45: #{tpu_custom_call.1} parent=1 // pred_fallthru
      _
    %1652 = vsyncpa [#allocation3], 1
    %1653 = vsyncpa [#allocation6], 1
    %1654 = vsyncpa [#allocation9], 1
    %1655 = vsyncpa [#allocation4], 1

</llo_original>
